<compile_context>
chip_gen: v7x
topology: tpu7x:2x2x1
jax: 0.10.0
libtpu: 0.0.40
codegen_flags: <defaults>
</compile_context>

<pallas_src>
import functools

import jax
import jax.numpy as jnp
from jax import lax
from jax.experimental import pallas as pl
from jax.experimental.pallas import tpu as pltpu

IN_F = 5                     # fcl1 in_features
HID = 10                     # fcl1 out_features / fcl2 in_features
SUBL = 8                     # f32 sublane packing factor
LANES = 128                  # vreg lane width
TILE_GRAN = SUBL * LANES     # 1024: batch-tile granularity (8 sublanes x 128 lanes)
DEFAULT_TILE_B = 128 * 1024  # amortizes per-grid-step overhead to <5% at large B
MAX_TILE_B = 256 * 1024      # keeps double-buffered blocks + temporaries << 64 MiB (v7x)
P_ROWS = HID * SUBL + SUBL   # 88 param-slab sublanes


def mlp_kernel(x_ref, p_ref, o_ref):
    # x_ref: (IN_F*8, TILE_C)  sublane-packed x: row 8k+j = feature k, batch chunk j
    # p_ref: (88, 128)         expanded params, VMEM-resident across all grid steps
    # o_ref: (1, 8, TILE_C)    sublane-packed output tile (lane-dense, unmasked stores)
    xp = x_ref[...]
    p = p_ref[...]
    w1e = p[0:HID * SUBL, 0:IN_F * SUBL]                      # (80, 40) block-diag fcl1.w
    b1e = p[0:HID * SUBL, IN_F * SUBL:IN_F * SUBL + 1]        # (80, 1)  fcl1.b (x8)
    w2e = p[HID * SUBL:P_ROWS, 0:HID * SUBL]                  # (8, 80)  block-diag fcl2.w
    b2e = p[HID * SUBL:P_ROWS, HID * SUBL:HID * SUBL + 1]     # (8, 1)   fcl2.b (x8)

    # Layer 1 + ReLU: single MXU matmul in the packed layout (frees the VALU slot).
    h = jnp.dot(w1e, xp, preferred_element_type=jnp.float32,
                precision=lax.Precision.HIGHEST) + b1e        # (80, TILE_C)
    h = jnp.maximum(h, 0.0)
    # Layer 2: second small MXU matmul; result lands directly in the packed output layout.
    y = jnp.dot(w2e, h, preferred_element_type=jnp.float32,
                precision=lax.Precision.HIGHEST) + b2e        # (8, TILE_C)
    o_ref[...] = y[None].astype(o_ref.dtype)


def pack_params(w1, b1, w2, b2):
    """Expand the tiny PyTorch-layout params into the sublane-packed block-diagonal
    form used by the kernel and pack them into a single (88, 128) f32 slab."""
    w1 = w1.astype(jnp.float32).reshape(HID, IN_F)
    b1 = b1.astype(jnp.float32).reshape(HID)
    w2 = w2.astype(jnp.float32).reshape(HID)
    b2 = b2.astype(jnp.float32).reshape(())
    eye = jnp.eye(SUBL, dtype=jnp.float32)
    # W1e[8m+j, 8k+l] = w1[m,k] * delta(j,l)   -> (80, 40)
    w1e = jnp.einsum("mk,jl->mjkl", w1, eye).reshape(HID * SUBL, IN_F * SUBL)
    # W2e[j, 8m+l]    = w2[m]   * delta(j,l)   -> (8, 80)
    w2e = jnp.einsum("m,jl->jml", w2, eye).reshape(SUBL, HID * SUBL)
    b1e = jnp.repeat(b1, SUBL)                                # (80,): b1e[8m+j] = b1[m]

    p = jnp.zeros((P_ROWS, LANES), jnp.float32)
    p = p.at[0:HID * SUBL, 0:IN_F * SUBL].set(w1e)
    p = p.at[0:HID * SUBL, IN_F * SUBL].set(b1e)
    p = p.at[HID * SUBL:P_ROWS, 0:HID * SUBL].set(w2e)
    p = p.at[HID * SUBL:P_ROWS, HID * SUBL].set(b2)
    return p


@functools.partial(jax.jit, static_argnames=("tile_b",))
def torch_net_forward(x, w1, b1, w2, b2, *, tile_b=DEFAULT_TILE_B):
    """x: (B, 5); params in PyTorch layout: w1 (10,5), b1 (10,), w2 (1,10), b2 (1,)."""
    B = x.shape[0]
    # Snap the batch tile to the sublane-packed granule (8*128), don't over-pad tiny
    # batches, and cap it so VMEM stays far below v7x's 64 MiB/TC.
    tile_b = max(TILE_GRAN,
                 min(tile_b, MAX_TILE_B, pl.cdiv(B, TILE_GRAN) * TILE_GRAN))
    tile_b = (tile_b // TILE_GRAN) * TILE_GRAN
    tile_c = tile_b // SUBL
    num_tiles = pl.cdiv(B, tile_b)
    b_padded = num_tiles * tile_b

    # Sublane-packed layout: xp[8k+j, i*tile_c+c] = x[i*tile_b + j*tile_c + c, k].
    # TODO(synk): this relayout is an extra XLA pass over x; a producer that can emit x
    # directly in this packed layout (or cache it across calls) removes ~half the
    # end-to-end HBM passes.
    xpad = jnp.pad(x.astype(jnp.float32), ((0, b_padded - B), (0, 0)))
    xp = (xpad.reshape(num_tiles, SUBL, tile_c, IN_F)
               .transpose(3, 1, 0, 2)
               .reshape(IN_F * SUBL, num_tiles * tile_c))
    params = pack_params(w1, b1, w2, b2)

    out = pl.pallas_call(
        mlp_kernel,
        out_shape=jax.ShapeDtypeStruct((num_tiles, SUBL, tile_c), jnp.float32),
        grid_spec=pltpu.PrefetchScalarGridSpec(
            num_scalar_prefetch=0,
            grid=(num_tiles,),
            in_specs=[
                pl.BlockSpec((IN_F * SUBL, tile_c), lambda i: (0, i)),  # streamed x
                pl.BlockSpec((P_ROWS, LANES), lambda i: (0, 0)),        # resident params
            ],
            out_specs=pl.BlockSpec((1, SUBL, tile_c), lambda i: (i, 0, 0)),
        ),
        compiler_params=pltpu.CompilerParams(
            # "parallel" lets Mosaic shard batch tiles across both TCs on v7x
            # (no-op on single-core v5e/v6e).
            dimension_semantics=("parallel",),
            # Large tiles overrun v5e's 16 MiB scoped-VMEM default; 48 MiB leaves
            # headroom and still fits v7x's 64 MiB/TC physical VMEM.
            vmem_limit_bytes=48 * 1024 * 1024,
        ),
    )(xp, params)

    # Packed-output flatten order equals batch order; slice off the padded tail.
    # (If the consumer could accept a flat (B,) result, the final reshape is droppable.)
    return out.reshape(b_padded)[:B].reshape(B, 1)


def init_params(key):
    # PyTorch nn.Linear default init: uniform +/- 1/sqrt(fan_in), PyTorch layouts.
    k1, k2, k3, k4 = jax.random.split(key, 4)
    bound1 = 1.0 / jnp.sqrt(5.0)
    bound2 = 1.0 / jnp.sqrt(10.0)
    w1 = jax.random.uniform(k1, (HID, IN_F), jnp.float32, -bound1, bound1)  # fcl1.weight
    b1 = jax.random.uniform(k2, (HID,), jnp.float32, -bound1, bound1)       # fcl1.bias
    w2 = jax.random.uniform(k3, (1, HID), jnp.float32, -bound2, bound2)     # fcl2.weight
    b2 = jax.random.uniform(k4, (1,), jnp.float32, -bound2, bound2)         # fcl2.bias
    return w1, b1, w2, b2


def _reference(x, w1, b1, w2, b2):
    return jnp.maximum(x @ w1.T + b1, 0.0) @ w2.T + b2


if __name__ == "__main__":
    key = jax.random.PRNGKey(0)
    kx, kx2, kp = jax.random.split(key, 3)
    w1, b1, w2, b2 = init_params(kp)

    # Small-batch check (single 1024-wide tile with padded tail).
    x = jax.random.normal(kx, (8, IN_F), jnp.float32)
    out = torch_net_forward(x, w1, b1, w2, b2)
    jax.block_until_ready(out)
    ref = _reference(x, w1, b1, w2, b2)
    assert out.shape == (8, 1)
    assert jnp.allclose(out, ref, atol=1e-4, rtol=1e-4), float(jnp.max(jnp.abs(out - ref)))

    # Multi-tile check: exercises the batch grid + ragged tail (2500 -> 3 tiles of 1024).
    x2 = jax.random.normal(kx2, (2500, IN_F), jnp.float32)
    out2 = torch_net_forward(x2, w1, b1, w2, b2, tile_b=1024)
    jax.block_until_ready(out2)
    ref2 = _reference(x2, w1, b1, w2, b2)
    assert out2.shape == (2500, 1)
    assert jnp.allclose(out2, ref2, atol=1e-4, rtol=1e-4), float(jnp.max(jnp.abs(out2 - ref2)))

    print("KERNEL_OK")
</pallas_src>

<mosaic_0001>
module attributes {stable_mosaic.version = 11 : i64} {
  func.func @mlp_kernel(%arg0: i32, %arg1: memref<40x128xf32, #tpu.memory_space<vmem>>, %arg2: memref<88x128xf32, #tpu.memory_space<vmem>>, %arg3: memref<1x8x128xf32, #tpu.memory_space<vmem>>) attributes {dimension_semantics = [#tpu.dimension_semantics<parallel>], iteration_bounds = array<i64: 1>, scalar_prefetch = 0 : i64, scratch_operands = 0 : i64, tpu.core_type = #tpu.core_type<tc>, window_params = [{transform_indices = @transform_0, window_bounds = array<i64: 40, 128>}, {pipeline_mode = #tpu.pipeline_mode<synchronous>, transform_indices = @transform_1, window_bounds = array<i64: 88, 128>}, {transform_indices = @transform_2, window_bounds = array<i64: 1, 8, 128>}]} {
    %c0 = arith.constant 0 : index
    %c0_0 = arith.constant 0 : index
    %0 = vector.load %arg1[%c0, %c0_0] : memref<40x128xf32, #tpu.memory_space<vmem>>, vector<40x128xf32>
    %c0_1 = arith.constant 0 : index
    %c0_2 = arith.constant 0 : index
    %1 = vector.load %arg2[%c0_1, %c0_2] : memref<88x128xf32, #tpu.memory_space<vmem>>, vector<88x128xf32>
    %2 = vector.extract_strided_slice %1 {offsets = [0, 0], sizes = [80, 40], strides = [1, 1]} : vector<88x128xf32> to vector<80x40xf32>
    %3 = vector.extract_strided_slice %1 {offsets = [0, 40], sizes = [80, 1], strides = [1, 1]} : vector<88x128xf32> to vector<80x1xf32>
    %4 = vector.extract_strided_slice %1 {offsets = [80, 0], sizes = [8, 80], strides = [1, 1]} : vector<88x128xf32> to vector<8x80xf32>
    %5 = vector.extract_strided_slice %1 {offsets = [80, 80], sizes = [8, 1], strides = [1, 1]} : vector<88x128xf32> to vector<8x1xf32>
    %cst = arith.constant dense<0.000000e+00> : vector<80x128xf32>
    %6 = tpu.matmul %2, %0, %cst {dimension_numbers = #tpu.dot_dimension_numbers<[1], [0], [0], [1], [0, 0, 1, 1], [], []>, precision = #tpu.contract_precision<fp32>} : vector<80x40xf32>, vector<40x128xf32>, vector<80x128xf32> -> vector<80x128xf32>
    %7 = vector.broadcast %3 : vector<80x1xf32> to vector<80x128xf32>
    %8 = arith.addf %6, %7 : vector<80x128xf32>
    %cst_3 = arith.constant 0.000000e+00 : f32
    %9 = vector.broadcast %cst_3 : f32 to vector<80x128xf32>
    %10 = arith.maximumf %8, %9 : vector<80x128xf32>
    %cst_4 = arith.constant dense<0.000000e+00> : vector<8x128xf32>
    %11 = tpu.matmul %4, %10, %cst_4 {dimension_numbers = #tpu.dot_dimension_numbers<[1], [0], [0], [1], [0, 0, 1, 1], [], []>, precision = #tpu.contract_precision<fp32>} : vector<8x80xf32>, vector<80x128xf32>, vector<8x128xf32> -> vector<8x128xf32>
    %12 = vector.broadcast %5 : vector<8x1xf32> to vector<8x128xf32>
    %13 = arith.addf %11, %12 : vector<8x128xf32>
    %14 = vector.shape_cast %13 : vector<8x128xf32> to vector<1x8x128xf32>
    %c0_5 = arith.constant 0 : index
    %c0_6 = arith.constant 0 : index
    %c0_7 = arith.constant 0 : index
    %15 = vector.load %arg3[%c0_5, %c0_6, %c0_7] : memref<1x8x128xf32, #tpu.memory_space<vmem>>, vector<1x8x128xf32>
    tpu.vector_store %arg3[%c0_5, %c0_6, %c0_7], %14 {strides = array<i32>} : memref<1x8x128xf32, #tpu.memory_space<vmem>>, vector<1x8x128xf32>,
    return
  }
  func.func @transform_0(%arg0: i32) -> (i32, i32) {
    %c0_i32 = arith.constant 0 : i32
    %c0_i32_0 = arith.constant 0 : i32
    return %c0_i32, %arg0 : i32, i32
  }
  func.func @transform_1(%arg0: i32) -> (i32, i32) {
    %c0_i32 = arith.constant 0 : i32
    %c0_i32_0 = arith.constant 0 : i32
    %c0_i32_1 = arith.constant 0 : i32
    return %c0_i32, %c0_i32_0 : i32, i32
  }
  func.func @transform_2(%arg0: i32) -> (i32, i32, i32) {
    %c0_i32 = arith.constant 0 : i32
    %c0_i32_0 = arith.constant 0 : i32
    %c0_i32_1 = arith.constant 0 : i32
    return %arg0, %c0_i32, %c0_i32_0 : i32, i32, i32
  }
}

</mosaic_0001>

<llo_original>
// kernel: torch_net_forward.1
$region0: #{torch_net_forward.1}
  #allocation0 [shape = 'u32[]', space=smem, size = 0x4, offset = 0x4, fixed_abs, tag = 'smem constant byte address 0x4 - core index']
  #allocation1 [shape = 'u32[144,128]{1,0:T(1,128)}', space=vmem, size = 0x12000, scoped, tag = 'internal scratch']
  %s0 = inlined_call_operand.vmem [shape: f32[40,128], index: 0, kind: input, shape index: {}]
  %s1 = inlined_call_operand.vmem [shape: f32[88,128], index: 1, kind: input, shape index: {}]
  %s2 = inlined_call_operand.vmem [shape: f32[1,8,128], index: 2, kind: output, shape index: {}]
  %s3 = sld [smem:[#allocation0]]
  $region18: #{torch_net_forward.1} parent=0
    _
  %s5 = ssub.s32 1, %s3
  %s6 = scalar_select 0, %s5, %s3
  // Predicated region
  $region2: #{torch_net_forward.1} parent=0 // pred_check
    _
  $region3: #{torch_net_forward.1} parent=0 // pred_check_branch
    %8 = sbr.rel (0) target = $region5
  $region4: #{torch_net_forward.1} parent=0 // pred_region
    _
  $region5: #{torch_net_forward.1} parent=0 // pred_fallthru
    _
  // Predicated region
  $region6: #{torch_net_forward.1} parent=0 // pred_check
    _
  $region7: #{torch_net_forward.1} parent=0 // pred_check_branch
    %10 = sbr.rel (0) target = $region9
  $region8: #{torch_net_forward.1} parent=0 // pred_region
    _
  $region9: #{torch_net_forward.1} parent=0 // pred_fallthru
    _
  %v11 = vld [vmem:[%s0] sm:$0xff]
  %v12 = vld [vmem:[%s0 + $0x8] sm:$0xff]
  %v13 = vld [vmem:[%s0 + $0x10] sm:$0xff]
  %v14 = vld [vmem:[%s0 + $0x18] sm:$0xff]
  %v15 = vld [vmem:[%s0 + $0x20] sm:$0xff]
  %v16 = vld [vmem:[%s1] sm:$0xff]
  %v17 = vld [vmem:[%s1 + $0x8] sm:$0xff]
  %v18 = vld [vmem:[%s1 + $0x10] sm:$0xff]
  %v19 = vld [vmem:[%s1 + $0x18] sm:$0xff]
  %v20 = vld [vmem:[%s1 + $0x20] sm:$0xff]
  %v21 = vld [vmem:[%s1 + $0x28] sm:$0xff]
  %v22 = vld [vmem:[%s1 + $0x30] sm:$0xff]
  %v23 = vld [vmem:[%s1 + $0x38] sm:$0xff]
  %v24 = vld [vmem:[%s1 + $0x40] sm:$0xff]
  %v25 = vld [vmem:[%s1 + $0x48] sm:$0xff]
  %v26 = vld [vmem:[%s1 + $0x50] sm:$0xff]
  %28 = vset.pattern.permute.xlu0 40
  %29 = vperm.xlu0 %28, %v16
  %v30 = vpop.permute.xlu0 %29
  %33 = vset.pattern.permute.xlu0 40
  %34 = vperm.xlu0 %33, %v17
  %v35 = vpop.permute.xlu0 %34
  %38 = vset.pattern.permute.xlu0 40
  %39 = vperm.xlu0 %38, %v18
  %v40 = vpop.permute.xlu0 %39
  %43 = vset.pattern.permute.xlu0 40
  %44 = vperm.xlu0 %43, %v19
  %v45 = vpop.permute.xlu0 %44
  %48 = vset.pattern.permute.xlu0 40
  %49 = vperm.xlu0 %48, %v20
  %v50 = vpop.permute.xlu0 %49
  %53 = vset.pattern.permute.xlu0 40
  %54 = vperm.xlu0 %53, %v21
  %v55 = vpop.permute.xlu0 %54
  %58 = vset.pattern.permute.xlu0 40
  %59 = vperm.xlu0 %58, %v22
  %v60 = vpop.permute.xlu0 %59
  %63 = vset.pattern.permute.xlu0 40
  %64 = vperm.xlu0 %63, %v23
  %v65 = vpop.permute.xlu0 %64
  %68 = vset.pattern.permute.xlu0 40
  %69 = vperm.xlu0 %68, %v24
  %v70 = vpop.permute.xlu0 %69
  %73 = vset.pattern.permute.xlu0 40
  %74 = vperm.xlu0 %73, %v25
  %v75 = vpop.permute.xlu0 %74
  %vm77 = vcmask 326656
  %v78 = vsel %vm77, %v16, 0
  %v80 = vsel %vm77, %v17, 0
  %v82 = vsel %vm77, %v18, 0
  %v84 = vsel %vm77, %v19, 0
  %v86 = vsel %vm77, %v20, 0
  %v88 = vsel %vm77, %v21, 0
  %v90 = vsel %vm77, %v22, 0
  %v92 = vsel %vm77, %v23, 0
  %v94 = vsel %vm77, %v24, 0
  %v96 = vsel %vm77, %v25, 0
  %98 = vmatprep.subr.mxu0 0.0
  %v99 = vand.u32 %v11, 4294901760
  %100 = vmatpush1.msra.mxu0 %v99
  %101 = vmatprep.subr.mxu0 0.0
  %v102 = vand.u32 %v12, 4294901760
  %103 = vmatpush1.msra.mxu0 %v102
  %104 = vmatprep.subr.mxu0 0.0
  %v105 = vand.u32 %v13, 4294901760
  %106 = vmatpush1.msra.mxu0 %v105
  %107 = vmatprep.subr.mxu0 0.0
  %v108 = vand.u32 %v14, 4294901760
  %109 = vmatpush1.msra.mxu0 %v108
  %110 = vmatprep.subr.mxu0 0.0
  %v111 = vand.u32 %v15, 4294901760
  %112 = vmatpush1.msra.mxu0 %v111
  %113 = vmatprep.subr.mxu0 0.0
  %114 = vmatpush1.msra.mxu0 0.0
  %115 = vmatprep.subr.mxu0 0.0
  %116 = vmatpush1.msra.mxu0 0.0
  %117 = vmatprep.subr.mxu0 0.0
  %118 = vmatpush1.msra.mxu0 0.0
  %119 = vmatprep.subr.mxu0 0.0
  %120 = vmatpush1.msra.mxu0 0.0
  %121 = vmatprep.subr.mxu0 0.0
  %122 = vmatpush1.msra.mxu0 0.0
  %123 = vmatprep.subr.mxu0 0.0
  %124 = vmatpush1.msra.mxu0 0.0
  %125 = vmatprep.subr.mxu0 0.0
  %126 = vmatpush1.msra.mxu0 0.0
  %127 = vmatprep.subr.mxu0 0.0
  %128 = vmatpush1.msra.mxu0 0.0
  %129 = vmatprep.subr.mxu0 0.0
  %130 = vmatpush1.msra.mxu0 0.0
  %131 = vmatprep.subr.mxu0 0.0
  %132 = vmatpush1.msra.mxu0 0.0
  %133 = vmatprep.subr.mxu0 0.0
  %134 = vmatpush1.msra.mxu0 0.0
  %135 = vmatprep.subr.mxu0 0.0
  %136 = vmatpush1.msra.mxu0 0.0
  %137 = vmatprep.subr.mxu0 0.0
  %138 = vmatpush1.msra.mxu0 0.0
  %139 = vmatprep.subr.mxu0 0.0
  %140 = vmatpush1.msra.mxu0 0.0
  %141 = vmatprep.subr.mxu0 0.0
  %142 = vmatpush1.msra.mxu0 0.0
  %143 = vmatprep.subr.mxu0 0.0
  %144 = vmatpush1.msra.mxu0 0.0
  %145 = vmatprep.subr.mxu0 0.0
  %146 = vmatpush1.msra.mxu0 0.0
  %147 = vmatprep.subr.mxu0 0.0
  %148 = vmatpush1.msra.mxu0 0.0
  %149 = vmatprep.subr.mxu0 0.0
  %150 = vmatpush1.msra.mxu0 0.0
  %151 = vmatprep.subr.mxu0 0.0
  %152 = vmatpush1.msra.mxu0 0.0
  %153 = vmatprep.subr.mxu0 0.0
  %154 = vmatpush1.msra.mxu0 0.0
  %155 = vmatprep.subr.mxu0 0.0
  %156 = vmatpush1.msra.mxu0 0.0
  %157 = vmatprep.subr.mxu0 0.0
  %158 = vmatpush1.msra.mxu0 0.0
  %159 = vmatprep.subr.mxu0 0.0
  %160 = vmatpush1.msra.mxu0 0.0
  %161 = vmatprep.subr.mxu0 0.0
  %162 = vmatpush1.msra.mxu0 0.0
  %163 = vmatprep.subr.mxu0 0.0
  %164 = vmatpush1.msra.mxu0 0.0
  %165 = vmatprep.subr.mxu0 0.0
  %166 = vmatpush1.msra.mxu0 0.0
  %167 = vmatprep.mubr.f32.mxu0 0.0
  %v168 = vand.u32 %v78, 4294901760
  %v169 = vsub.f32 %v78, %v168
  %v170 = vand.u32 %v169, 4294901760
  %v171 = vsub.f32 %v169, %v170
  %v172 = vand.u32 %v171, 4294901760
  %173 = vmatmul.mubr.f32.gmra.mrb[0].mxu0 %v172
  %v174 = vpop.f32.mrb[0].mxu0
  %v175 = vadd.f32 %v30, %v174
  %v176 = vpop.f32.mrb[0].mxu0
  %177 = vmatprep.mubr.f32.mxu0 0.0
  %v178 = vand.u32 %v80, 4294901760
  %v179 = vsub.f32 %v80, %v178
  %v180 = vand.u32 %v179, 4294901760
  %v181 = vsub.f32 %v179, %v180
  %v182 = vand.u32 %v181, 4294901760
  %183 = vmatmul.mubr.f32.gmra.mrb[0].mxu0 %v182
  %v184 = vpop.f32.mrb[0].mxu0
  %v185 = vadd.f32 %v35, %v184
  %v186 = vpop.f32.mrb[0].mxu0
  %187 = vmatprep.mubr.f32.mxu0 0.0
  %v188 = vand.u32 %v82, 4294901760
  %v189 = vsub.f32 %v82, %v188
  %v190 = vand.u32 %v189, 4294901760
  %v191 = vsub.f32 %v189, %v190
  %v192 = vand.u32 %v191, 4294901760
  %193 = vmatmul.mubr.f32.gmra.mrb[0].mxu0 %v192
  %v194 = vpop.f32.mrb[0].mxu0
  %v195 = vadd.f32 %v40, %v194
  %v196 = vpop.f32.mrb[0].mxu0
  %197 = vmatprep.mubr.f32.mxu0 0.0
  %v198 = vand.u32 %v84, 4294901760
  %v199 = vsub.f32 %v84, %v198
  %v200 = vand.u32 %v199, 4294901760
  %v201 = vsub.f32 %v199, %v200
  %v202 = vand.u32 %v201, 4294901760
  %203 = vmatmul.mubr.f32.gmra.mrb[0].mxu0 %v202
  %v204 = vpop.f32.mrb[0].mxu0
  %v205 = vadd.f32 %v45, %v204
  %v206 = vpop.f32.mrb[0].mxu0
  %207 = vmatprep.mubr.f32.mxu0 0.0
  %v208 = vand.u32 %v86, 4294901760
  %v209 = vsub.f32 %v86, %v208
  %v210 = vand.u32 %v209, 4294901760
  %v211 = vsub.f32 %v209, %v210
  %v212 = vand.u32 %v211, 4294901760
  %213 = vmatmul.mubr.f32.gmra.mrb[0].mxu0 %v212
  %v214 = vpop.f32.mrb[0].mxu0
  %v215 = vadd.f32 %v50, %v214
  %v216 = vpop.f32.mrb[0].mxu0
  %217 = vmatprep.mubr.f32.mxu0 0.0
  %v218 = vand.u32 %v88, 4294901760
  %v219 = vsub.f32 %v88, %v218
  %v220 = vand.u32 %v219, 4294901760
  %v221 = vsub.f32 %v219, %v220
  %v222 = vand.u32 %v221, 4294901760
  %223 = vmatmul.mubr.f32.gmra.mrb[0].mxu0 %v222
  %v224 = vpop.f32.mrb[0].mxu0
  %v225 = vadd.f32 %v55, %v224
  %v226 = vpop.f32.mrb[0].mxu0
  %227 = vmatprep.mubr.f32.mxu0 0.0
  %v228 = vand.u32 %v90, 4294901760
  %v229 = vsub.f32 %v90, %v228
  %v230 = vand.u32 %v229, 4294901760
  %v231 = vsub.f32 %v229, %v230
  %v232 = vand.u32 %v231, 4294901760
  %233 = vmatmul.mubr.f32.gmra.mrb[0].mxu0 %v232
  %v234 = vpop.f32.mrb[0].mxu0
  %v235 = vadd.f32 %v60, %v234
  %v236 = vpop.f32.mrb[0].mxu0
  %237 = vmatprep.mubr.f32.mxu0 0.0
  %v238 = vand.u32 %v92, 4294901760
  %v239 = vsub.f32 %v92, %v238
  %v240 = vand.u32 %v239, 4294901760
  %v241 = vsub.f32 %v239, %v240
  %v242 = vand.u32 %v241, 4294901760
  %243 = vmatmul.mubr.f32.gmra.mrb[0].mxu0 %v242
  %v244 = vpop.f32.mrb[0].mxu0
  %v245 = vadd.f32 %v65, %v244
  %v246 = vpop.f32.mrb[0].mxu0
  %247 = vmatprep.mubr.f32.mxu0 0.0
  %v248 = vand.u32 %v94, 4294901760
  %v249 = vsub.f32 %v94, %v248
  %v250 = vand.u32 %v249, 4294901760
  %v251 = vsub.f32 %v249, %v250
  %v252 = vand.u32 %v251, 4294901760
  %253 = vmatmul.mubr.f32.gmra.mrb[0].mxu0 %v252
  %v254 = vpop.f32.mrb[0].mxu0
  %v255 = vadd.f32 %v70, %v254
  %v256 = vpop.f32.mrb[0].mxu0
  %257 = vmatprep.mubr.f32.mxu0 0.0
  %v258 = vand.u32 %v96, 4294901760
  %v259 = vsub.f32 %v96, %v258
  %v260 = vand.u32 %v259, 4294901760
  %v261 = vsub.f32 %v259, %v260
  %v262 = vand.u32 %v261, 4294901760
  %263 = vmatmul.mubr.f32.gmra.mrb[0].mxu0 %v262
  %v264 = vpop.f32.mrb[0].mxu0
  %v265 = vadd.f32 %v75, %v264
  %v266 = vpop.f32.mrb[0].mxu0
  %267 = vdwg.mxu0
  %268 = vmatprep.subr.mxu0 0.0
  %v269 = vand.u32 %v11, 4294901760
  %v270 = vsub.f32 %v11, %v269
  %v271 = vand.u32 %v270, 4294901760
  %v272 = vsub.f32 %v270, %v271
  %v273 = vand.u32 %v272, 4294901760
  %274 = vmatpush1.msra.mxu0 %v273
  %275 = vmatprep.subr.mxu0 0.0
  %v276 = vand.u32 %v12, 4294901760
  %v277 = vsub.f32 %v12, %v276
  %v278 = vand.u32 %v277, 4294901760
  %v279 = vsub.f32 %v277, %v278
  %v280 = vand.u32 %v279, 4294901760
  %281 = vmatpush1.msra.mxu0 %v280
  %282 = vmatprep.subr.mxu0 0.0
  %v283 = vand.u32 %v13, 4294901760
  %v284 = vsub.f32 %v13, %v283
  %v285 = vand.u32 %v284, 4294901760
  %v286 = vsub.f32 %v284, %v285
  %v287 = vand.u32 %v286, 4294901760
  %288 = vmatpush1.msra.mxu0 %v287
  %289 = vmatprep.subr.mxu0 0.0
  %v290 = vand.u32 %v14, 4294901760
  %v291 = vsub.f32 %v14, %v290
  %v292 = vand.u32 %v291, 4294901760
  %v293 = vsub.f32 %v291, %v292
  %v294 = vand.u32 %v293, 4294901760
  %295 = vmatpush1.msra.mxu0 %v294
  %296 = vmatprep.subr.mxu0 0.0
  %v297 = vand.u32 %v15, 4294901760
  %v298 = vsub.f32 %v15, %v297
  %v299 = vand.u32 %v298, 4294901760
  %v300 = vsub.f32 %v298, %v299
  %v301 = vand.u32 %v300, 4294901760
  %302 = vmatpush1.msra.mxu0 %v301
  %303 = vmatprep.subr.mxu0 0.0
  %304 = vmatpush1.msra.mxu0 0.0
  %305 = vmatprep.subr.mxu0 0.0
  %306 = vmatpush1.msra.mxu0 0.0
  %307 = vmatprep.subr.mxu0 0.0
  %308 = vmatpush1.msra.mxu0 0.0
  %309 = vmatprep.subr.mxu0 0.0
  %310 = vmatpush1.msra.mxu0 0.0
  %311 = vmatprep.subr.mxu0 0.0
  %312 = vmatpush1.msra.mxu0 0.0
  %313 = vmatprep.subr.mxu0 0.0
  %314 = vmatpush1.msra.mxu0 0.0
  %315 = vmatprep.subr.mxu0 0.0
  %316 = vmatpush1.msra.mxu0 0.0
  %317 = vmatprep.subr.mxu0 0.0
  %318 = vmatpush1.msra.mxu0 0.0
  %319 = vmatprep.subr.mxu0 0.0
  %320 = vmatpush1.msra.mxu0 0.0
  %321 = vmatprep.subr.mxu0 0.0
  %322 = vmatpush1.msra.mxu0 0.0
  %323 = vmatprep.subr.mxu0 0.0
  %324 = vmatpush1.msra.mxu0 0.0
  %325 = vmatprep.subr.mxu0 0.0
  %326 = vmatpush1.msra.mxu0 0.0
  %327 = vmatprep.subr.mxu0 0.0
  %328 = vmatpush1.msra.mxu0 0.0
  %329 = vmatprep.subr.mxu0 0.0
  %330 = vmatpush1.msra.mxu0 0.0
  %331 = vmatprep.subr.mxu0 0.0
  %332 = vmatpush1.msra.mxu0 0.0
  %333 = vmatprep.subr.mxu0 0.0
  %334 = vmatpush1.msra.mxu0 0.0
  %335 = vmatprep.subr.mxu0 0.0
  %336 = vmatpush1.msra.mxu0 0.0
  %337 = vmatprep.subr.mxu0 0.0
  %338 = vmatpush1.msra.mxu0 0.0
  %339 = vmatprep.subr.mxu0 0.0
  %340 = vmatpush1.msra.mxu0 0.0
  %341 = vmatprep.subr.mxu0 0.0
  %342 = vmatpush1.msra.mxu0 0.0
  %343 = vmatprep.subr.mxu0 0.0
  %344 = vmatpush1.msra.mxu0 0.0
  %345 = vmatprep.subr.mxu0 0.0
  %346 = vmatpush1.msra.mxu0 0.0
  %347 = vmatprep.subr.mxu0 0.0
  %348 = vmatpush1.msra.mxu0 0.0
  %349 = vmatprep.subr.mxu0 0.0
  %350 = vmatpush1.msra.mxu0 0.0
  %351 = vmatprep.subr.mxu0 0.0
  %352 = vmatpush1.msra.mxu0 0.0
  %353 = vmatprep.subr.mxu0 0.0
  %354 = vmatpush1.msra.mxu0 0.0
  %355 = vmatprep.subr.mxu0 0.0
  %356 = vmatpush1.msra.mxu0 0.0
  %357 = vmatprep.mubr.f32.mxu0 0.0
  %v358 = vand.u32 %v78, 4294901760
  %359 = vmatmul.mubr.f32.gmra.mrb[0].mxu0 %v358
  %v360 = vpop.f32.mrb[0].mxu0
  %v361 = vadd.f32 %v175, %v360
  %v362 = vpop.f32.mrb[0].mxu0
  %363 = vmatprep.mubr.f32.mxu0 0.0
  %v364 = vand.u32 %v80, 4294901760
  %365 = vmatmul.mubr.f32.gmra.mrb[0].mxu0 %v364
  %v366 = vpop.f32.mrb[0].mxu0
  %v367 = vadd.f32 %v185, %v366
  %v368 = vpop.f32.mrb[0].mxu0
  %369 = vmatprep.mubr.f32.mxu0 0.0
  %v370 = vand.u32 %v82, 4294901760
  %371 = vmatmul.mubr.f32.gmra.mrb[0].mxu0 %v370
  %v372 = vpop.f32.mrb[0].mxu0
  %v373 = vadd.f32 %v195, %v372
  %v374 = vpop.f32.mrb[0].mxu0
  %375 = vmatprep.mubr.f32.mxu0 0.0
  %v376 = vand.u32 %v84, 4294901760
  %377 = vmatmul.mubr.f32.gmra.mrb[0].mxu0 %v376
  %v378 = vpop.f32.mrb[0].mxu0
  %v379 = vadd.f32 %v205, %v378
  %v380 = vpop.f32.mrb[0].mxu0
  %381 = vmatprep.mubr.f32.mxu0 0.0
  %v382 = vand.u32 %v86, 4294901760
  %383 = vmatmul.mubr.f32.gmra.mrb[0].mxu0 %v382
  %v384 = vpop.f32.mrb[0].mxu0
  %v385 = vadd.f32 %v215, %v384
  %v386 = vpop.f32.mrb[0].mxu0
  %387 = vmatprep.mubr.f32.mxu0 0.0
  %v388 = vand.u32 %v88, 4294901760
  %389 = vmatmul.mubr.f32.gmra.mrb[0].mxu0 %v388
  %v390 = vpop.f32.mrb[0].mxu0
  %v391 = vadd.f32 %v225, %v390
  %v392 = vpop.f32.mrb[0].mxu0
  %393 = vmatprep.mubr.f32.mxu0 0.0
  %v394 = vand.u32 %v90, 4294901760
  %395 = vmatmul.mubr.f32.gmra.mrb[0].mxu0 %v394
  %v396 = vpop.f32.mrb[0].mxu0
  %v397 = vadd.f32 %v235, %v396
  %v398 = vpop.f32.mrb[0].mxu0
  %399 = vmatprep.mubr.f32.mxu0 0.0
  %v400 = vand.u32 %v92, 4294901760
  %401 = vmatmul.mubr.f32.gmra.mrb[0].mxu0 %v400
  %v402 = vpop.f32.mrb[0].mxu0
  %v403 = vadd.f32 %v245, %v402
  %v404 = vpop.f32.mrb[0].mxu0
  %405 = vmatprep.mubr.f32.mxu0 0.0
  %v406 = vand.u32 %v94, 4294901760
  %407 = vmatmul.mubr.f32.gmra.mrb[0].mxu0 %v406
  %v408 = vpop.f32.mrb[0].mxu0
  %v409 = vadd.f32 %v255, %v408
  %v410 = vpop.f32.mrb[0].mxu0
  %411 = vmatprep.mubr.f32.mxu0 0.0
  %v412 = vand.u32 %v96, 4294901760
  %413 = vmatmul.mubr.f32.gmra.mrb[0].mxu0 %v412
  %v414 = vpop.f32.mrb[0].mxu0
  %v415 = vadd.f32 %v265, %v414
  %v416 = vpop.f32.mrb[0].mxu0
  %417 = vdwg.mxu0
  %418 = vmatprep.subr.mxu0 0.0
  %v419 = vand.u32 %v11, 4294901760
  %v420 = vsub.f32 %v11, %v419
  %421 = vmatpush1.msra.mxu0 %v420
  %422 = vmatprep.subr.mxu0 0.0
  %v423 = vand.u32 %v12, 4294901760
  %v424 = vsub.f32 %v12, %v423
  %425 = vmatpush1.msra.mxu0 %v424
  %426 = vmatprep.subr.mxu0 0.0
  %v427 = vand.u32 %v13, 4294901760
  %v428 = vsub.f32 %v13, %v427
  %429 = vmatpush1.msra.mxu0 %v428
  %430 = vmatprep.subr.mxu0 0.0
  %v431 = vand.u32 %v14, 4294901760
  %v432 = vsub.f32 %v14, %v431
  %433 = vmatpush1.msra.mxu0 %v432
  %434 = vmatprep.subr.mxu0 0.0
  %v435 = vand.u32 %v15, 4294901760
  %v436 = vsub.f32 %v15, %v435
  %437 = vmatpush1.msra.mxu0 %v436
  %438 = vmatprep.subr.mxu0 0.0
  %439 = vmatpush1.msra.mxu0 0.0
  %440 = vmatprep.subr.mxu0 0.0
  %441 = vmatpush1.msra.mxu0 0.0
  %442 = vmatprep.subr.mxu0 0.0
  %443 = vmatpush1.msra.mxu0 0.0
  %444 = vmatprep.subr.mxu0 0.0
  %445 = vmatpush1.msra.mxu0 0.0
  %446 = vmatprep.subr.mxu0 0.0
  %447 = vmatpush1.msra.mxu0 0.0
  %448 = vmatprep.subr.mxu0 0.0
  %449 = vmatpush1.msra.mxu0 0.0
  %450 = vmatprep.subr.mxu0 0.0
  %451 = vmatpush1.msra.mxu0 0.0
  %452 = vmatprep.subr.mxu0 0.0
  %453 = vmatpush1.msra.mxu0 0.0
  %454 = vmatprep.subr.mxu0 0.0
  %455 = vmatpush1.msra.mxu0 0.0
  %456 = vmatprep.subr.mxu0 0.0
  %457 = vmatpush1.msra.mxu0 0.0
  %458 = vmatprep.subr.mxu0 0.0
  %459 = vmatpush1.msra.mxu0 0.0
  %460 = vmatprep.subr.mxu0 0.0
  %461 = vmatpush1.msra.mxu0 0.0
  %462 = vmatprep.subr.mxu0 0.0
  %463 = vmatpush1.msra.mxu0 0.0
  %464 = vmatprep.subr.mxu0 0.0
  %465 = vmatpush1.msra.mxu0 0.0
  %466 = vmatprep.subr.mxu0 0.0
  %467 = vmatpush1.msra.mxu0 0.0
  %468 = vmatprep.subr.mxu0 0.0
  %469 = vmatpush1.msra.mxu0 0.0
  %470 = vmatprep.subr.mxu0 0.0
  %471 = vmatpush1.msra.mxu0 0.0
  %472 = vmatprep.subr.mxu0 0.0
  %473 = vmatpush1.msra.mxu0 0.0
  %474 = vmatprep.subr.mxu0 0.0
  %475 = vmatpush1.msra.mxu0 0.0
  %476 = vmatprep.subr.mxu0 0.0
  %477 = vmatpush1.msra.mxu0 0.0
  %478 = vmatprep.subr.mxu0 0.0
  %479 = vmatpush1.msra.mxu0 0.0
  %480 = vmatprep.subr.mxu0 0.0
  %481 = vmatpush1.msra.mxu0 0.0
  %482 = vmatprep.subr.mxu0 0.0
  %483 = vmatpush1.msra.mxu0 0.0
  %484 = vmatprep.subr.mxu0 0.0
  %485 = vmatpush1.msra.mxu0 0.0
  %486 = vmatprep.subr.mxu0 0.0
  %487 = vmatpush1.msra.mxu0 0.0
  %488 = vmatprep.subr.mxu0 0.0
  %489 = vmatpush1.msra.mxu0 0.0
  %490 = vmatprep.subr.mxu0 0.0
  %491 = vmatpush1.msra.mxu0 0.0
  %492 = vmatprep.mubr.f32.mxu0 0.0
  %v493 = vand.u32 %v78, 4294901760
  %v494 = vsub.f32 %v78, %v493
  %495 = vmatmul.mubr.f32.gmra.mrb[0].mxu0 %v494
  %v496 = vpop.f32.mrb[0].mxu0
  %v497 = vadd.f32 %v361, %v496
  %v498 = vpop.f32.mrb[0].mxu0
  %499 = vmatprep.mubr.f32.mxu0 0.0
  %v500 = vand.u32 %v80, 4294901760
  %v501 = vsub.f32 %v80, %v500
  %502 = vmatmul.mubr.f32.gmra.mrb[0].mxu0 %v501
  %v503 = vpop.f32.mrb[0].mxu0
  %v504 = vadd.f32 %v367, %v503
  %v505 = vpop.f32.mrb[0].mxu0
  %506 = vmatprep.mubr.f32.mxu0 0.0
  %v507 = vand.u32 %v82, 4294901760
  %v508 = vsub.f32 %v82, %v507
  %509 = vmatmul.mubr.f32.gmra.mrb[0].mxu0 %v508
  %v510 = vpop.f32.mrb[0].mxu0
  %v511 = vadd.f32 %v373, %v510
  %v512 = vpop.f32.mrb[0].mxu0
  %513 = vmatprep.mubr.f32.mxu0 0.0
  %v514 = vand.u32 %v84, 4294901760
  %v515 = vsub.f32 %v84, %v514
  %516 = vmatmul.mubr.f32.gmra.mrb[0].mxu0 %v515
  %v517 = vpop.f32.mrb[0].mxu0
  %v518 = vadd.f32 %v379, %v517
  %v519 = vpop.f32.mrb[0].mxu0
  %520 = vmatprep.mubr.f32.mxu0 0.0
  %v521 = vand.u32 %v86, 4294901760
  %v522 = vsub.f32 %v86, %v521
  %523 = vmatmul.mubr.f32.gmra.mrb[0].mxu0 %v522
  %v524 = vpop.f32.mrb[0].mxu0
  %v525 = vadd.f32 %v385, %v524
  %v526 = vpop.f32.mrb[0].mxu0
  %527 = vmatprep.mubr.f32.mxu0 0.0
  %v528 = vand.u32 %v88, 4294901760
  %v529 = vsub.f32 %v88, %v528
  %530 = vmatmul.mubr.f32.gmra.mrb[0].mxu0 %v529
  %v531 = vpop.f32.mrb[0].mxu0
  %v532 = vadd.f32 %v391, %v531
  %v533 = vpop.f32.mrb[0].mxu0
  %534 = vmatprep.mubr.f32.mxu0 0.0
  %v535 = vand.u32 %v90, 4294901760
  %v536 = vsub.f32 %v90, %v535
  %537 = vmatmul.mubr.f32.gmra.mrb[0].mxu0 %v536
  %v538 = vpop.f32.mrb[0].mxu0
  %v539 = vadd.f32 %v397, %v538
  %v540 = vpop.f32.mrb[0].mxu0
  %541 = vmatprep.mubr.f32.mxu0 0.0
  %v542 = vand.u32 %v92, 4294901760
  %v543 = vsub.f32 %v92, %v542
  %544 = vmatmul.mubr.f32.gmra.mrb[0].mxu0 %v543
  %v545 = vpop.f32.mrb[0].mxu0
  %v546 = vadd.f32 %v403, %v545
  %v547 = vpop.f32.mrb[0].mxu0
  %548 = vmatprep.mubr.f32.mxu0 0.0
  %v549 = vand.u32 %v94, 4294901760
  %v550 = vsub.f32 %v94, %v549
  %551 = vmatmul.mubr.f32.gmra.mrb[0].mxu0 %v550
  %v552 = vpop.f32.mrb[0].mxu0
  %v553 = vadd.f32 %v409, %v552
  %v554 = vpop.f32.mrb[0].mxu0
  %555 = vmatprep.mubr.f32.mxu0 0.0
  %v556 = vand.u32 %v96, 4294901760
  %v557 = vsub.f32 %v96, %v556
  %558 = vmatmul.mubr.f32.gmra.mrb[0].mxu0 %v557
  %v559 = vpop.f32.mrb[0].mxu0
  %v560 = vadd.f32 %v415, %v559
  %v561 = vpop.f32.mrb[0].mxu0
  %562 = vdwg.mxu0
  %563 = vmatprep.subr.mxu0 0.0
  %v564 = vand.u32 %v11, 4294901760
  %565 = vmatpush1.msra.mxu0 %v564
  %566 = vmatprep.subr.mxu0 0.0
  %v567 = vand.u32 %v12, 4294901760
  %568 = vmatpush1.msra.mxu0 %v567
  %569 = vmatprep.subr.mxu0 0.0
  %v570 = vand.u32 %v13, 4294901760
  %571 = vmatpush1.msra.mxu0 %v570
  %572 = vmatprep.subr.mxu0 0.0
  %v573 = vand.u32 %v14, 4294901760
  %574 = vmatpush1.msra.mxu0 %v573
  %575 = vmatprep.subr.mxu0 0.0
  %v576 = vand.u32 %v15, 4294901760
  %577 = vmatpush1.msra.mxu0 %v576
  %578 = vmatprep.subr.mxu0 0.0
  %579 = vmatpush1.msra.mxu0 0.0
  %580 = vmatprep.subr.mxu0 0.0
  %581 = vmatpush1.msra.mxu0 0.0
  %582 = vmatprep.subr.mxu0 0.0
  %583 = vmatpush1.msra.mxu0 0.0
  %584 = vmatprep.subr.mxu0 0.0
  %585 = vmatpush1.msra.mxu0 0.0
  %586 = vmatprep.subr.mxu0 0.0
  %587 = vmatpush1.msra.mxu0 0.0
  %588 = vmatprep.subr.mxu0 0.0
  %589 = vmatpush1.msra.mxu0 0.0
  %590 = vmatprep.subr.mxu0 0.0
  %591 = vmatpush1.msra.mxu0 0.0
  %592 = vmatprep.subr.mxu0 0.0
  %593 = vmatpush1.msra.mxu0 0.0
  %594 = vmatprep.subr.mxu0 0.0
  %595 = vmatpush1.msra.mxu0 0.0
  %596 = vmatprep.subr.mxu0 0.0
  %597 = vmatpush1.msra.mxu0 0.0
  %598 = vmatprep.subr.mxu0 0.0
  %599 = vmatpush1.msra.mxu0 0.0
  %600 = vmatprep.subr.mxu0 0.0
  %601 = vmatpush1.msra.mxu0 0.0
  %602 = vmatprep.subr.mxu0 0.0
  %603 = vmatpush1.msra.mxu0 0.0
  %604 = vmatprep.subr.mxu0 0.0
  %605 = vmatpush1.msra.mxu0 0.0
  %606 = vmatprep.subr.mxu0 0.0
  %607 = vmatpush1.msra.mxu0 0.0
  %608 = vmatprep.subr.mxu0 0.0
  %609 = vmatpush1.msra.mxu0 0.0
  %610 = vmatprep.subr.mxu0 0.0
  %611 = vmatpush1.msra.mxu0 0.0
  %612 = vmatprep.subr.mxu0 0.0
  %613 = vmatpush1.msra.mxu0 0.0
  %614 = vmatprep.subr.mxu0 0.0
  %615 = vmatpush1.msra.mxu0 0.0
  %616 = vmatprep.subr.mxu0 0.0
  %617 = vmatpush1.msra.mxu0 0.0
  %618 = vmatprep.subr.mxu0 0.0
  %619 = vmatpush1.msra.mxu0 0.0
  %620 = vmatprep.subr.mxu0 0.0
  %621 = vmatpush1.msra.mxu0 0.0
  %622 = vmatprep.subr.mxu0 0.0
  %623 = vmatpush1.msra.mxu0 0.0
  %624 = vmatprep.subr.mxu0 0.0
  %625 = vmatpush1.msra.mxu0 0.0
  %626 = vmatprep.subr.mxu0 0.0
  %627 = vmatpush1.msra.mxu0 0.0
  %628 = vmatprep.subr.mxu0 0.0
  %629 = vmatpush1.msra.mxu0 0.0
  %630 = vmatprep.subr.mxu0 0.0
  %631 = vmatpush1.msra.mxu0 0.0
  %632 = vmatprep.mubr.f32.mxu0 0.0
  %v633 = vand.u32 %v78, 4294901760
  %v634 = vsub.f32 %v78, %v633
  %v635 = vand.u32 %v634, 4294901760
  %636 = vmatmul.mubr.f32.gmra.mrb[0].mxu0 %v635
  %v637 = vpop.f32.mrb[0].mxu0
  %v638 = vadd.f32 %v497, %v637
  %v639 = vpop.f32.mrb[0].mxu0
  %640 = vmatprep.mubr.f32.mxu0 0.0
  %v641 = vand.u32 %v80, 4294901760
  %v642 = vsub.f32 %v80, %v641
  %v643 = vand.u32 %v642, 4294901760
  %644 = vmatmul.mubr.f32.gmra.mrb[0].mxu0 %v643
  %v645 = vpop.f32.mrb[0].mxu0
  %v646 = vadd.f32 %v504, %v645
  %v647 = vpop.f32.mrb[0].mxu0
  %648 = vmatprep.mubr.f32.mxu0 0.0
  %v649 = vand.u32 %v82, 4294901760
  %v650 = vsub.f32 %v82, %v649
  %v651 = vand.u32 %v650, 4294901760
  %652 = vmatmul.mubr.f32.gmra.mrb[0].mxu0 %v651
  %v653 = vpop.f32.mrb[0].mxu0
  %v654 = vadd.f32 %v511, %v653
  %v655 = vpop.f32.mrb[0].mxu0
  %656 = vmatprep.mubr.f32.mxu0 0.0
  %v657 = vand.u32 %v84, 4294901760
  %v658 = vsub.f32 %v84, %v657
  %v659 = vand.u32 %v658, 4294901760
  %660 = vmatmul.mubr.f32.gmra.mrb[0].mxu0 %v659
  %v661 = vpop.f32.mrb[0].mxu0
  %v662 = vadd.f32 %v518, %v661
  %v663 = vpop.f32.mrb[0].mxu0
  %664 = vmatprep.mubr.f32.mxu0 0.0
  %v665 = vand.u32 %v86, 4294901760
  %v666 = vsub.f32 %v86, %v665
  %v667 = vand.u32 %v666, 4294901760
  %668 = vmatmul.mubr.f32.gmra.mrb[0].mxu0 %v667
  %v669 = vpop.f32.mrb[0].mxu0
  %v670 = vadd.f32 %v525, %v669
  %v671 = vpop.f32.mrb[0].mxu0
  %672 = vmatprep.mubr.f32.mxu0 0.0
  %v673 = vand.u32 %v88, 4294901760
  %v674 = vsub.f32 %v88, %v673
  %v675 = vand.u32 %v674, 4294901760
  %676 = vmatmul.mubr.f32.gmra.mrb[0].mxu0 %v675
  %v677 = vpop.f32.mrb[0].mxu0
  %v678 = vadd.f32 %v532, %v677
  %v679 = vpop.f32.mrb[0].mxu0
  %680 = vmatprep.mubr.f32.mxu0 0.0
  %v681 = vand.u32 %v90, 4294901760
  %v682 = vsub.f32 %v90, %v681
  %v683 = vand.u32 %v682, 4294901760
  %684 = vmatmul.mubr.f32.gmra.mrb[0].mxu0 %v683
  %v685 = vpop.f32.mrb[0].mxu0
  %v686 = vadd.f32 %v539, %v685
  %v687 = vpop.f32.mrb[0].mxu0
  %688 = vmatprep.mubr.f32.mxu0 0.0
  %v689 = vand.u32 %v92, 4294901760
  %v690 = vsub.f32 %v92, %v689
  %v691 = vand.u32 %v690, 4294901760
  %692 = vmatmul.mubr.f32.gmra.mrb[0].mxu0 %v691
  %v693 = vpop.f32.mrb[0].mxu0
  %v694 = vadd.f32 %v546, %v693
  %v695 = vpop.f32.mrb[0].mxu0
  %696 = vmatprep.mubr.f32.mxu0 0.0
  %v697 = vand.u32 %v94, 4294901760
  %v698 = vsub.f32 %v94, %v697
  %v699 = vand.u32 %v698, 4294901760
  %700 = vmatmul.mubr.f32.gmra.mrb[0].mxu0 %v699
  %v701 = vpop.f32.mrb[0].mxu0
  %v702 = vadd.f32 %v553, %v701
  %v703 = vpop.f32.mrb[0].mxu0
  %704 = vmatprep.mubr.f32.mxu0 0.0
  %v705 = vand.u32 %v96, 4294901760
  %v706 = vsub.f32 %v96, %v705
  %v707 = vand.u32 %v706, 4294901760
  %708 = vmatmul.mubr.f32.gmra.mrb[0].mxu0 %v707
  %v709 = vpop.f32.mrb[0].mxu0
  %v710 = vadd.f32 %v560, %v709
  %v711 = vpop.f32.mrb[0].mxu0
  %712 = vdwg.mxu0
  %713 = vmatprep.subr.mxu0 0.0
  %v714 = vand.u32 %v11, 4294901760
  %v715 = vsub.f32 %v11, %v714
  %v716 = vand.u32 %v715, 4294901760
  %717 = vmatpush1.msra.mxu0 %v716
  %718 = vmatprep.subr.mxu0 0.0
  %v719 = vand.u32 %v12, 4294901760
  %v720 = vsub.f32 %v12, %v719
  %v721 = vand.u32 %v720, 4294901760
  %722 = vmatpush1.msra.mxu0 %v721
  %723 = vmatprep.subr.mxu0 0.0
  %v724 = vand.u32 %v13, 4294901760
  %v725 = vsub.f32 %v13, %v724
  %v726 = vand.u32 %v725, 4294901760
  %727 = vmatpush1.msra.mxu0 %v726
  %728 = vmatprep.subr.mxu0 0.0
  %v729 = vand.u32 %v14, 4294901760
  %v730 = vsub.f32 %v14, %v729
  %v731 = vand.u32 %v730, 4294901760
  %732 = vmatpush1.msra.mxu0 %v731
  %733 = vmatprep.subr.mxu0 0.0
  %v734 = vand.u32 %v15, 4294901760
  %v735 = vsub.f32 %v15, %v734
  %v736 = vand.u32 %v735, 4294901760
  %737 = vmatpush1.msra.mxu0 %v736
  %738 = vmatprep.subr.mxu0 0.0
  %739 = vmatpush1.msra.mxu0 0.0
  %740 = vmatprep.subr.mxu0 0.0
  %741 = vmatpush1.msra.mxu0 0.0
  %742 = vmatprep.subr.mxu0 0.0
  %743 = vmatpush1.msra.mxu0 0.0
  %744 = vmatprep.subr.mxu0 0.0
  %745 = vmatpush1.msra.mxu0 0.0
  %746 = vmatprep.subr.mxu0 0.0
  %747 = vmatpush1.msra.mxu0 0.0
  %748 = vmatprep.subr.mxu0 0.0
  %749 = vmatpush1.msra.mxu0 0.0
  %750 = vmatprep.subr.mxu0 0.0
  %751 = vmatpush1.msra.mxu0 0.0
  %752 = vmatprep.subr.mxu0 0.0
  %753 = vmatpush1.msra.mxu0 0.0
  %754 = vmatprep.subr.mxu0 0.0
  %755 = vmatpush1.msra.mxu0 0.0
  %756 = vmatprep.subr.mxu0 0.0
  %757 = vmatpush1.msra.mxu0 0.0
  %758 = vmatprep.subr.mxu0 0.0
  %759 = vmatpush1.msra.mxu0 0.0
  %760 = vmatprep.subr.mxu0 0.0
  %761 = vmatpush1.msra.mxu0 0.0
  %762 = vmatprep.subr.mxu0 0.0
  %763 = vmatpush1.msra.mxu0 0.0
  %764 = vmatprep.subr.mxu0 0.0
  %765 = vmatpush1.msra.mxu0 0.0
  %766 = vmatprep.subr.mxu0 0.0
  %767 = vmatpush1.msra.mxu0 0.0
  %768 = vmatprep.subr.mxu0 0.0
  %769 = vmatpush1.msra.mxu0 0.0
  %770 = vmatprep.subr.mxu0 0.0
  %771 = vmatpush1.msra.mxu0 0.0
  %772 = vmatprep.subr.mxu0 0.0
  %773 = vmatpush1.msra.mxu0 0.0
  %774 = vmatprep.subr.mxu0 0.0
  %775 = vmatpush1.msra.mxu0 0.0
  %776 = vmatprep.subr.mxu0 0.0
  %777 = vmatpush1.msra.mxu0 0.0
  %778 = vmatprep.subr.mxu0 0.0
  %779 = vmatpush1.msra.mxu0 0.0
  %780 = vmatprep.subr.mxu0 0.0
  %781 = vmatpush1.msra.mxu0 0.0
  %782 = vmatprep.subr.mxu0 0.0
  %783 = vmatpush1.msra.mxu0 0.0
  %784 = vmatprep.subr.mxu0 0.0
  %785 = vmatpush1.msra.mxu0 0.0
  %786 = vmatprep.subr.mxu0 0.0
  %787 = vmatpush1.msra.mxu0 0.0
  %788 = vmatprep.subr.mxu0 0.0
  %789 = vmatpush1.msra.mxu0 0.0
  %790 = vmatprep.subr.mxu0 0.0
  %791 = vmatpush1.msra.mxu0 0.0
  %792 = vmatprep.mubr.f32.mxu0 0.0
  %v793 = vand.u32 %v78, 4294901760
  %794 = vmatmul.mubr.f32.gmra.mrb[0].mxu0 %v793
  %v795 = vpop.f32.mrb[0].mxu0
  %v796 = vadd.f32 %v638, %v795
  %v797 = vpop.f32.mrb[0].mxu0
  %798 = vmatprep.mubr.f32.mxu0 0.0
  %v799 = vand.u32 %v80, 4294901760
  %800 = vmatmul.mubr.f32.gmra.mrb[0].mxu0 %v799
  %v801 = vpop.f32.mrb[0].mxu0
  %v802 = vadd.f32 %v646, %v801
  %v803 = vpop.f32.mrb[0].mxu0
  %804 = vmatprep.mubr.f32.mxu0 0.0
  %v805 = vand.u32 %v82, 4294901760
  %806 = vmatmul.mubr.f32.gmra.mrb[0].mxu0 %v805
  %v807 = vpop.f32.mrb[0].mxu0
  %v808 = vadd.f32 %v654, %v807
  %v809 = vpop.f32.mrb[0].mxu0
  %810 = vmatprep.mubr.f32.mxu0 0.0
  %v811 = vand.u32 %v84, 4294901760
  %812 = vmatmul.mubr.f32.gmra.mrb[0].mxu0 %v811
  %v813 = vpop.f32.mrb[0].mxu0
  %v814 = vadd.f32 %v662, %v813
  %v815 = vpop.f32.mrb[0].mxu0
  %816 = vmatprep.mubr.f32.mxu0 0.0
  %v817 = vand.u32 %v86, 4294901760
  %818 = vmatmul.mubr.f32.gmra.mrb[0].mxu0 %v817
  %v819 = vpop.f32.mrb[0].mxu0
  %v820 = vadd.f32 %v670, %v819
  %v821 = vpop.f32.mrb[0].mxu0
  %822 = vmatprep.mubr.f32.mxu0 0.0
  %v823 = vand.u32 %v88, 4294901760
  %824 = vmatmul.mubr.f32.gmra.mrb[0].mxu0 %v823
  %v825 = vpop.f32.mrb[0].mxu0
  %v826 = vadd.f32 %v678, %v825
  %v827 = vpop.f32.mrb[0].mxu0
  %828 = vmatprep.mubr.f32.mxu0 0.0
  %v829 = vand.u32 %v90, 4294901760
  %830 = vmatmul.mubr.f32.gmra.mrb[0].mxu0 %v829
  %v831 = vpop.f32.mrb[0].mxu0
  %v832 = vadd.f32 %v686, %v831
  %v833 = vpop.f32.mrb[0].mxu0
  %834 = vmatprep.mubr.f32.mxu0 0.0
  %v835 = vand.u32 %v92, 4294901760
  %836 = vmatmul.mubr.f32.gmra.mrb[0].mxu0 %v835
  %v837 = vpop.f32.mrb[0].mxu0
  %v838 = vadd.f32 %v694, %v837
  %v839 = vpop.f32.mrb[0].mxu0
  %840 = vmatprep.mubr.f32.mxu0 0.0
  %v841 = vand.u32 %v94, 4294901760
  %842 = vmatmul.mubr.f32.gmra.mrb[0].mxu0 %v841
  %v843 = vpop.f32.mrb[0].mxu0
  %v844 = vadd.f32 %v702, %v843
  %v845 = vpop.f32.mrb[0].mxu0
  %846 = vmatprep.mubr.f32.mxu0 0.0
  %v847 = vand.u32 %v96, 4294901760
  %848 = vmatmul.mubr.f32.gmra.mrb[0].mxu0 %v847
  %v849 = vpop.f32.mrb[0].mxu0
  %v850 = vadd.f32 %v710, %v849
  %v851 = vpop.f32.mrb[0].mxu0
  %852 = vdwg.mxu0
  %853 = vmatprep.subr.mxu0 0.0
  %v854 = vand.u32 %v11, 4294901760
  %855 = vmatpush1.msra.mxu0 %v854
  %856 = vmatprep.subr.mxu0 0.0
  %v857 = vand.u32 %v12, 4294901760
  %858 = vmatpush1.msra.mxu0 %v857
  %859 = vmatprep.subr.mxu0 0.0
  %v860 = vand.u32 %v13, 4294901760
  %861 = vmatpush1.msra.mxu0 %v860
  %862 = vmatprep.subr.mxu0 0.0
  %v863 = vand.u32 %v14, 4294901760
  %864 = vmatpush1.msra.mxu0 %v863
  %865 = vmatprep.subr.mxu0 0.0
  %v866 = vand.u32 %v15, 4294901760
  %867 = vmatpush1.msra.mxu0 %v866
  %868 = vmatprep.subr.mxu0 0.0
  %869 = vmatpush1.msra.mxu0 0.0
  %870 = vmatprep.subr.mxu0 0.0
  %871 = vmatpush1.msra.mxu0 0.0
  %872 = vmatprep.subr.mxu0 0.0
  %873 = vmatpush1.msra.mxu0 0.0
  %874 = vmatprep.subr.mxu0 0.0
  %875 = vmatpush1.msra.mxu0 0.0
  %876 = vmatprep.subr.mxu0 0.0
  %877 = vmatpush1.msra.mxu0 0.0
  %878 = vmatprep.subr.mxu0 0.0
  %879 = vmatpush1.msra.mxu0 0.0
  %880 = vmatprep.subr.mxu0 0.0
  %881 = vmatpush1.msra.mxu0 0.0
  %882 = vmatprep.subr.mxu0 0.0
  %883 = vmatpush1.msra.mxu0 0.0
  %884 = vmatprep.subr.mxu0 0.0
  %885 = vmatpush1.msra.mxu0 0.0
  %886 = vmatprep.subr.mxu0 0.0
  %887 = vmatpush1.msra.mxu0 0.0
  %888 = vmatprep.subr.mxu0 0.0
  %889 = vmatpush1.msra.mxu0 0.0
  %890 = vmatprep.subr.mxu0 0.0
  %891 = vmatpush1.msra.mxu0 0.0
  %892 = vmatprep.subr.mxu0 0.0
  %893 = vmatpush1.msra.mxu0 0.0
  %894 = vmatprep.subr.mxu0 0.0
  %895 = vmatpush1.msra.mxu0 0.0
  %896 = vmatprep.subr.mxu0 0.0
  %897 = vmatpush1.msra.mxu0 0.0
  %898 = vmatprep.subr.mxu0 0.0
  %899 = vmatpush1.msra.mxu0 0.0
  %900 = vmatprep.subr.mxu0 0.0
  %901 = vmatpush1.msra.mxu0 0.0
  %902 = vmatprep.subr.mxu0 0.0
  %903 = vmatpush1.msra.mxu0 0.0
  %904 = vmatprep.subr.mxu0 0.0
  %905 = vmatpush1.msra.mxu0 0.0
  %906 = vmatprep.subr.mxu0 0.0
  %907 = vmatpush1.msra.mxu0 0.0
  %908 = vmatprep.subr.mxu0 0.0
  %909 = vmatpush1.msra.mxu0 0.0
  %910 = vmatprep.subr.mxu0 0.0
  %911 = vmatpush1.msra.mxu0 0.0
  %912 = vmatprep.subr.mxu0 0.0
  %913 = vmatpush1.msra.mxu0 0.0
  %914 = vmatprep.subr.mxu0 0.0
  %915 = vmatpush1.msra.mxu0 0.0
  %916 = vmatprep.subr.mxu0 0.0
  %917 = vmatpush1.msra.mxu0 0.0
  %918 = vmatprep.subr.mxu0 0.0
  %919 = vmatpush1.msra.mxu0 0.0
  %920 = vmatprep.subr.mxu0 0.0
  %921 = vmatpush1.msra.mxu0 0.0
  %922 = vmatprep.mubr.f32.mxu0 0.0
  %v923 = vand.u32 %v78, 4294901760
  %924 = vmatmul.mubr.f32.gmra.mrb[0].mxu0 %v923
  %v925 = vpop.f32.mrb[0].mxu0
  %v926 = vadd.f32 %v796, %v925
  %v927 = vpop.f32.mrb[0].mxu0
  %928 = vmatprep.mubr.f32.mxu0 0.0
  %v929 = vand.u32 %v80, 4294901760
  %930 = vmatmul.mubr.f32.gmra.mrb[0].mxu0 %v929
  %v931 = vpop.f32.mrb[0].mxu0
  %v932 = vadd.f32 %v802, %v931
  %v933 = vpop.f32.mrb[0].mxu0
  %934 = vmatprep.mubr.f32.mxu0 0.0
  %v935 = vand.u32 %v82, 4294901760
  %936 = vmatmul.mubr.f32.gmra.mrb[0].mxu0 %v935
  %v937 = vpop.f32.mrb[0].mxu0
  %v938 = vadd.f32 %v808, %v937
  %v939 = vpop.f32.mrb[0].mxu0
  %940 = vmatprep.mubr.f32.mxu0 0.0
  %v941 = vand.u32 %v84, 4294901760
  %942 = vmatmul.mubr.f32.gmra.mrb[0].mxu0 %v941
  %v943 = vpop.f32.mrb[0].mxu0
  %v944 = vadd.f32 %v814, %v943
  %v945 = vpop.f32.mrb[0].mxu0
  %946 = vmatprep.mubr.f32.mxu0 0.0
  %v947 = vand.u32 %v86, 4294901760
  %948 = vmatmul.mubr.f32.gmra.mrb[0].mxu0 %v947
  %v949 = vpop.f32.mrb[0].mxu0
  %v950 = vadd.f32 %v820, %v949
  %v951 = vpop.f32.mrb[0].mxu0
  %952 = vmatprep.mubr.f32.mxu0 0.0
  %v953 = vand.u32 %v88, 4294901760
  %954 = vmatmul.mubr.f32.gmra.mrb[0].mxu0 %v953
  %v955 = vpop.f32.mrb[0].mxu0
  %v956 = vadd.f32 %v826, %v955
  %v957 = vpop.f32.mrb[0].mxu0
  %958 = vmatprep.mubr.f32.mxu0 0.0
  %v959 = vand.u32 %v90, 4294901760
  %960 = vmatmul.mubr.f32.gmra.mrb[0].mxu0 %v959
  %v961 = vpop.f32.mrb[0].mxu0
  %v962 = vadd.f32 %v832, %v961
  %v963 = vpop.f32.mrb[0].mxu0
  %964 = vmatprep.mubr.f32.mxu0 0.0
  %v965 = vand.u32 %v92, 4294901760
  %966 = vmatmul.mubr.f32.gmra.mrb[0].mxu0 %v965
  %v967 = vpop.f32.mrb[0].mxu0
  %v968 = vadd.f32 %v838, %v967
  %v969 = vpop.f32.mrb[0].mxu0
  %970 = vmatprep.mubr.f32.mxu0 0.0
  %v971 = vand.u32 %v94, 4294901760
  %972 = vmatmul.mubr.f32.gmra.mrb[0].mxu0 %v971
  %v973 = vpop.f32.mrb[0].mxu0
  %v974 = vadd.f32 %v844, %v973
  %v975 = vpop.f32.mrb[0].mxu0
  %976 = vmatprep.mubr.f32.mxu0 0.0
  %v977 = vand.u32 %v96, 4294901760
  %978 = vmatmul.mubr.f32.gmra.mrb[0].mxu0 %v977
  %v979 = vpop.f32.mrb[0].mxu0
  %v980 = vadd.f32 %v850, %v979
  %v981 = vpop.f32.mrb[0].mxu0
  %982 = vdwg.mxu0
  %v983 = vmax.f32 %v926, 0.0
  %v984 = vmax.f32 %v932, 0.0
  %v985 = vmax.f32 %v938, 0.0
  %v986 = vmax.f32 %v944, 0.0
  %v987 = vmax.f32 %v950, 0.0
  %v988 = vmax.f32 %v956, 0.0
  %v989 = vmax.f32 %v962, 0.0
  %v990 = vmax.f32 %v968, 0.0
  %v991 = vmax.f32 %v974, 0.0
  %v992 = vmax.f32 %v980, 0.0
  %994 = vset.pattern.permute.xlu0 80
  %995 = vperm.xlu0 %994, %v26
  %v996 = vpop.permute.xlu0 %995
  %vm998 = vcmask 654336
  %v999 = vsel %vm998, %v26, 0
  %1001 = vmatprep.subr.mxu0 0.0
  %v1002 = vand.u32 %v983, 4294901760
  %1003 = vmatpush1.msra.mxu0 %v1002
  %1004 = vmatprep.subr.mxu0 0.0
  %v1005 = vand.u32 %v984, 4294901760
  %1006 = vmatpush1.msra.mxu0 %v1005
  %1007 = vmatprep.subr.mxu0 0.0
  %v1008 = vand.u32 %v985, 4294901760
  %1009 = vmatpush1.msra.mxu0 %v1008
  %1010 = vmatprep.subr.mxu0 0.0
  %v1011 = vand.u32 %v986, 4294901760
  %1012 = vmatpush1.msra.mxu0 %v1011
  %1013 = vmatprep.subr.mxu0 0.0
  %v1014 = vand.u32 %v987, 4294901760
  %1015 = vmatpush1.msra.mxu0 %v1014
  %1016 = vmatprep.subr.mxu0 0.0
  %v1017 = vand.u32 %v988, 4294901760
  %1018 = vmatpush1.msra.mxu0 %v1017
  %1019 = vmatprep.subr.mxu0 0.0
  %v1020 = vand.u32 %v989, 4294901760
  %1021 = vmatpush1.msra.mxu0 %v1020
  %1022 = vmatprep.subr.mxu0 0.0
  %v1023 = vand.u32 %v990, 4294901760
  %1024 = vmatpush1.msra.mxu0 %v1023
  %1025 = vmatprep.subr.mxu0 0.0
  %v1026 = vand.u32 %v991, 4294901760
  %1027 = vmatpush1.msra.mxu0 %v1026
  %1028 = vmatprep.subr.mxu0 0.0
  %v1029 = vand.u32 %v992, 4294901760
  %1030 = vmatpush1.msra.mxu0 %v1029
  %1031 = vmatprep.subr.mxu0 0.0
  %1032 = vmatpush1.msra.mxu0 0.0
  %1033 = vmatprep.subr.mxu0 0.0
  %1034 = vmatpush1.msra.mxu0 0.0
  %1035 = vmatprep.subr.mxu0 0.0
  %1036 = vmatpush1.msra.mxu0 0.0
  %1037 = vmatprep.subr.mxu0 0.0
  %1038 = vmatpush1.msra.mxu0 0.0
  %1039 = vmatprep.subr.mxu0 0.0
  %1040 = vmatpush1.msra.mxu0 0.0
  %1041 = vmatprep.subr.mxu0 0.0
  %1042 = vmatpush1.msra.mxu0 0.0
  %1043 = vmatprep.subr.mxu0 0.0
  %1044 = vmatpush1.msra.mxu0 0.0
  %1045 = vmatprep.subr.mxu0 0.0
  %1046 = vmatpush1.msra.mxu0 0.0
  %1047 = vmatprep.subr.mxu0 0.0
  %1048 = vmatpush1.msra.mxu0 0.0
  %1049 = vmatprep.subr.mxu0 0.0
  %1050 = vmatpush1.msra.mxu0 0.0
  %1051 = vmatprep.subr.mxu0 0.0
  %1052 = vmatpush1.msra.mxu0 0.0
  %1053 = vmatprep.subr.mxu0 0.0
  %1054 = vmatpush1.msra.mxu0 0.0
  %1055 = vmatprep.subr.mxu0 0.0
  %1056 = vmatpush1.msra.mxu0 0.0
  %1057 = vmatprep.subr.mxu0 0.0
  %1058 = vmatpush1.msra.mxu0 0.0
  %1059 = vmatprep.subr.mxu0 0.0
  %1060 = vmatpush1.msra.mxu0 0.0
  %1061 = vmatprep.subr.mxu0 0.0
  %1062 = vmatpush1.msra.mxu0 0.0
  %1063 = vmatprep.subr.mxu0 0.0
  %1064 = vmatpush1.msra.mxu0 0.0
  %1065 = vmatprep.subr.mxu0 0.0
  %1066 = vmatpush1.msra.mxu0 0.0
  %1067 = vmatprep.subr.mxu0 0.0
  %1068 = vmatpush1.msra.mxu0 0.0
  %1069 = vmatprep.subr.mxu0 0.0
  %1070 = vmatpush1.msra.mxu0 0.0
  %1071 = vmatprep.subr.mxu0 0.0
  %1072 = vmatpush1.msra.mxu0 0.0
  %1073 = vmatprep.subr.mxu0 0.0
  %1074 = vmatpush1.msra.mxu0 0.0
  %1075 = vmatprep.mubr.f32.mxu0 0.0
  %v1076 = vand.u32 %v999, 4294901760
  %v1077 = vsub.f32 %v999, %v1076
  %v1078 = vand.u32 %v1077, 4294901760
  %v1079 = vsub.f32 %v1077, %v1078
  %v1080 = vand.u32 %v1079, 4294901760
  %1081 = vmatmul.mubr.f32.gmra.mrb[0].mxu0 %v1080
  %v1082 = vpop.f32.mrb[0].mxu0
  %v1083 = vadd.f32 %v996, %v1082
  %v1084 = vpop.f32.mrb[0].mxu0
  %1085 = vdwg.mxu0
  %1086 = vmatprep.subr.mxu0 0.0
  %v1087 = vand.u32 %v983, 4294901760
  %v1088 = vsub.f32 %v983, %v1087
  %v1089 = vand.u32 %v1088, 4294901760
  %v1090 = vsub.f32 %v1088, %v1089
  %v1091 = vand.u32 %v1090, 4294901760
  %1092 = vmatpush1.msra.mxu0 %v1091
  %1093 = vmatprep.subr.mxu0 0.0
  %v1094 = vand.u32 %v984, 4294901760
  %v1095 = vsub.f32 %v984, %v1094
  %v1096 = vand.u32 %v1095, 4294901760
  %v1097 = vsub.f32 %v1095, %v1096
  %v1098 = vand.u32 %v1097, 4294901760
  %1099 = vmatpush1.msra.mxu0 %v1098
  %1100 = vmatprep.subr.mxu0 0.0
  %v1101 = vand.u32 %v985, 4294901760
  %v1102 = vsub.f32 %v985, %v1101
  %v1103 = vand.u32 %v1102, 4294901760
  %v1104 = vsub.f32 %v1102, %v1103
  %v1105 = vand.u32 %v1104, 4294901760
  %1106 = vmatpush1.msra.mxu0 %v1105
  %1107 = vmatprep.subr.mxu0 0.0
  %v1108 = vand.u32 %v986, 4294901760
  %v1109 = vsub.f32 %v986, %v1108
  %v1110 = vand.u32 %v1109, 4294901760
  %v1111 = vsub.f32 %v1109, %v1110
  %v1112 = vand.u32 %v1111, 4294901760
  %1113 = vmatpush1.msra.mxu0 %v1112
  %1114 = vmatprep.subr.mxu0 0.0
  %v1115 = vand.u32 %v987, 4294901760
  %v1116 = vsub.f32 %v987, %v1115
  %v1117 = vand.u32 %v1116, 4294901760
  %v1118 = vsub.f32 %v1116, %v1117
  %v1119 = vand.u32 %v1118, 4294901760
  %1120 = vmatpush1.msra.mxu0 %v1119
  %1121 = vmatprep.subr.mxu0 0.0
  %v1122 = vand.u32 %v988, 4294901760
  %v1123 = vsub.f32 %v988, %v1122
  %v1124 = vand.u32 %v1123, 4294901760
  %v1125 = vsub.f32 %v1123, %v1124
  %v1126 = vand.u32 %v1125, 4294901760
  %1127 = vmatpush1.msra.mxu0 %v1126
  %1128 = vmatprep.subr.mxu0 0.0
  %v1129 = vand.u32 %v989, 4294901760
  %v1130 = vsub.f32 %v989, %v1129
  %v1131 = vand.u32 %v1130, 4294901760
  %v1132 = vsub.f32 %v1130, %v1131
  %v1133 = vand.u32 %v1132, 4294901760
  %1134 = vmatpush1.msra.mxu0 %v1133
  %1135 = vmatprep.subr.mxu0 0.0
  %v1136 = vand.u32 %v990, 4294901760
  %v1137 = vsub.f32 %v990, %v1136
  %v1138 = vand.u32 %v1137, 4294901760
  %v1139 = vsub.f32 %v1137, %v1138
  %v1140 = vand.u32 %v1139, 4294901760
  %1141 = vmatpush1.msra.mxu0 %v1140
  %1142 = vmatprep.subr.mxu0 0.0
  %v1143 = vand.u32 %v991, 4294901760
  %v1144 = vsub.f32 %v991, %v1143
  %v1145 = vand.u32 %v1144, 4294901760
  %v1146 = vsub.f32 %v1144, %v1145
  %v1147 = vand.u32 %v1146, 4294901760
  %1148 = vmatpush1.msra.mxu0 %v1147
  %1149 = vmatprep.subr.mxu0 0.0
  %v1150 = vand.u32 %v992, 4294901760
  %v1151 = vsub.f32 %v992, %v1150
  %v1152 = vand.u32 %v1151, 4294901760
  %v1153 = vsub.f32 %v1151, %v1152
  %v1154 = vand.u32 %v1153, 4294901760
  %1155 = vmatpush1.msra.mxu0 %v1154
  %1156 = vmatprep.subr.mxu0 0.0
  %1157 = vmatpush1.msra.mxu0 0.0
  %1158 = vmatprep.subr.mxu0 0.0
  %1159 = vmatpush1.msra.mxu0 0.0
  %1160 = vmatprep.subr.mxu0 0.0
  %1161 = vmatpush1.msra.mxu0 0.0
  %1162 = vmatprep.subr.mxu0 0.0
  %1163 = vmatpush1.msra.mxu0 0.0
  %1164 = vmatprep.subr.mxu0 0.0
  %1165 = vmatpush1.msra.mxu0 0.0
  %1166 = vmatprep.subr.mxu0 0.0
  %1167 = vmatpush1.msra.mxu0 0.0
  %1168 = vmatprep.subr.mxu0 0.0
  %1169 = vmatpush1.msra.mxu0 0.0
  %1170 = vmatprep.subr.mxu0 0.0
  %1171 = vmatpush1.msra.mxu0 0.0
  %1172 = vmatprep.subr.mxu0 0.0
  %1173 = vmatpush1.msra.mxu0 0.0
  %1174 = vmatprep.subr.mxu0 0.0
  %1175 = vmatpush1.msra.mxu0 0.0
  %1176 = vmatprep.subr.mxu0 0.0
  %1177 = vmatpush1.msra.mxu0 0.0
  %1178 = vmatprep.subr.mxu0 0.0
  %1179 = vmatpush1.msra.mxu0 0.0
  %1180 = vmatprep.subr.mxu0 0.0
  %1181 = vmatpush1.msra.mxu0 0.0
  %1182 = vmatprep.subr.mxu0 0.0
  %1183 = vmatpush1.msra.mxu0 0.0
  %1184 = vmatprep.subr.mxu0 0.0
  %1185 = vmatpush1.msra.mxu0 0.0
  %1186 = vmatprep.subr.mxu0 0.0
  %1187 = vmatpush1.msra.mxu0 0.0
  %1188 = vmatprep.subr.mxu0 0.0
  %1189 = vmatpush1.msra.mxu0 0.0
  %1190 = vmatprep.subr.mxu0 0.0
  %1191 = vmatpush1.msra.mxu0 0.0
  %1192 = vmatprep.subr.mxu0 0.0
  %1193 = vmatpush1.msra.mxu0 0.0
  %1194 = vmatprep.subr.mxu0 0.0
  %1195 = vmatpush1.msra.mxu0 0.0
  %1196 = vmatprep.subr.mxu0 0.0
  %1197 = vmatpush1.msra.mxu0 0.0
  %1198 = vmatprep.subr.mxu0 0.0
  %1199 = vmatpush1.msra.mxu0 0.0
  %1200 = vmatprep.mubr.f32.mxu0 0.0
  %v1201 = vand.u32 %v999, 4294901760
  %1202 = vmatmul.mubr.f32.gmra.mrb[0].mxu0 %v1201
  %v1203 = vpop.f32.mrb[0].mxu0
  %v1204 = vadd.f32 %v1083, %v1203
  %v1205 = vpop.f32.mrb[0].mxu0
  %1206 = vdwg.mxu0
  %1207 = vmatprep.subr.mxu0 0.0
  %v1208 = vand.u32 %v983, 4294901760
  %v1209 = vsub.f32 %v983, %v1208
  %1210 = vmatpush1.msra.mxu0 %v1209
  %1211 = vmatprep.subr.mxu0 0.0
  %v1212 = vand.u32 %v984, 4294901760
  %v1213 = vsub.f32 %v984, %v1212
  %1214 = vmatpush1.msra.mxu0 %v1213
  %1215 = vmatprep.subr.mxu0 0.0
  %v1216 = vand.u32 %v985, 4294901760
  %v1217 = vsub.f32 %v985, %v1216
  %1218 = vmatpush1.msra.mxu0 %v1217
  %1219 = vmatprep.subr.mxu0 0.0
  %v1220 = vand.u32 %v986, 4294901760
  %v1221 = vsub.f32 %v986, %v1220
  %1222 = vmatpush1.msra.mxu0 %v1221
  %1223 = vmatprep.subr.mxu0 0.0
  %v1224 = vand.u32 %v987, 4294901760
  %v1225 = vsub.f32 %v987, %v1224
  %1226 = vmatpush1.msra.mxu0 %v1225
  %1227 = vmatprep.subr.mxu0 0.0
  %v1228 = vand.u32 %v988, 4294901760
  %v1229 = vsub.f32 %v988, %v1228
  %1230 = vmatpush1.msra.mxu0 %v1229
  %1231 = vmatprep.subr.mxu0 0.0
  %v1232 = vand.u32 %v989, 4294901760
  %v1233 = vsub.f32 %v989, %v1232
  %1234 = vmatpush1.msra.mxu0 %v1233
  %1235 = vmatprep.subr.mxu0 0.0
  %v1236 = vand.u32 %v990, 4294901760
  %v1237 = vsub.f32 %v990, %v1236
  %1238 = vmatpush1.msra.mxu0 %v1237
  %1239 = vmatprep.subr.mxu0 0.0
  %v1240 = vand.u32 %v991, 4294901760
  %v1241 = vsub.f32 %v991, %v1240
  %1242 = vmatpush1.msra.mxu0 %v1241
  %1243 = vmatprep.subr.mxu0 0.0
  %v1244 = vand.u32 %v992, 4294901760
  %v1245 = vsub.f32 %v992, %v1244
  %1246 = vmatpush1.msra.mxu0 %v1245
  %1247 = vmatprep.subr.mxu0 0.0
  %1248 = vmatpush1.msra.mxu0 0.0
  %1249 = vmatprep.subr.mxu0 0.0
  %1250 = vmatpush1.msra.mxu0 0.0
  %1251 = vmatprep.subr.mxu0 0.0
  %1252 = vmatpush1.msra.mxu0 0.0
  %1253 = vmatprep.subr.mxu0 0.0
  %1254 = vmatpush1.msra.mxu0 0.0
  %1255 = vmatprep.subr.mxu0 0.0
  %1256 = vmatpush1.msra.mxu0 0.0
  %1257 = vmatprep.subr.mxu0 0.0
  %1258 = vmatpush1.msra.mxu0 0.0
  %1259 = vmatprep.subr.mxu0 0.0
  %1260 = vmatpush1.msra.mxu0 0.0
  %1261 = vmatprep.subr.mxu0 0.0
  %1262 = vmatpush1.msra.mxu0 0.0
  %1263 = vmatprep.subr.mxu0 0.0
  %1264 = vmatpush1.msra.mxu0 0.0
  %1265 = vmatprep.subr.mxu0 0.0
  %1266 = vmatpush1.msra.mxu0 0.0
  %1267 = vmatprep.subr.mxu0 0.0
  %1268 = vmatpush1.msra.mxu0 0.0
  %1269 = vmatprep.subr.mxu0 0.0
  %1270 = vmatpush1.msra.mxu0 0.0
  %1271 = vmatprep.subr.mxu0 0.0
  %1272 = vmatpush1.msra.mxu0 0.0
  %1273 = vmatprep.subr.mxu0 0.0
  %1274 = vmatpush1.msra.mxu0 0.0
  %1275 = vmatprep.subr.mxu0 0.0
  %1276 = vmatpush1.msra.mxu0 0.0
  %1277 = vmatprep.subr.mxu0 0.0
  %1278 = vmatpush1.msra.mxu0 0.0
  %1279 = vmatprep.subr.mxu0 0.0
  %1280 = vmatpush1.msra.mxu0 0.0
  %1281 = vmatprep.subr.mxu0 0.0
  %1282 = vmatpush1.msra.mxu0 0.0
  %1283 = vmatprep.subr.mxu0 0.0
  %1284 = vmatpush1.msra.mxu0 0.0
  %1285 = vmatprep.subr.mxu0 0.0
  %1286 = vmatpush1.msra.mxu0 0.0
  %1287 = vmatprep.subr.mxu0 0.0
  %1288 = vmatpush1.msra.mxu0 0.0
  %1289 = vmatprep.subr.mxu0 0.0
  %1290 = vmatpush1.msra.mxu0 0.0
  %1291 = vmatprep.mubr.f32.mxu0 0.0
  %v1292 = vand.u32 %v999, 4294901760
  %v1293 = vsub.f32 %v999, %v1292
  %1294 = vmatmul.mubr.f32.gmra.mrb[0].mxu0 %v1293
  %v1295 = vpop.f32.mrb[0].mxu0
  %v1296 = vadd.f32 %v1204, %v1295
  %v1297 = vpop.f32.mrb[0].mxu0
  %1298 = vdwg.mxu0
  %1299 = vmatprep.subr.mxu0 0.0
  %v1300 = vand.u32 %v983, 4294901760
  %1301 = vmatpush1.msra.mxu0 %v1300
  %1302 = vmatprep.subr.mxu0 0.0
  %v1303 = vand.u32 %v984, 4294901760
  %1304 = vmatpush1.msra.mxu0 %v1303
  %1305 = vmatprep.subr.mxu0 0.0
  %v1306 = vand.u32 %v985, 4294901760
  %1307 = vmatpush1.msra.mxu0 %v1306
  %1308 = vmatprep.subr.mxu0 0.0
  %v1309 = vand.u32 %v986, 4294901760
  %1310 = vmatpush1.msra.mxu0 %v1309
  %1311 = vmatprep.subr.mxu0 0.0
  %v1312 = vand.u32 %v987, 4294901760
  %1313 = vmatpush1.msra.mxu0 %v1312
  %1314 = vmatprep.subr.mxu0 0.0
  %v1315 = vand.u32 %v988, 4294901760
  %1316 = vmatpush1.msra.mxu0 %v1315
  %1317 = vmatprep.subr.mxu0 0.0
  %v1318 = vand.u32 %v989, 4294901760
  %1319 = vmatpush1.msra.mxu0 %v1318
  %1320 = vmatprep.subr.mxu0 0.0
  %v1321 = vand.u32 %v990, 4294901760
  %1322 = vmatpush1.msra.mxu0 %v1321
  %1323 = vmatprep.subr.mxu0 0.0
  %v1324 = vand.u32 %v991, 4294901760
  %1325 = vmatpush1.msra.mxu0 %v1324
  %1326 = vmatprep.subr.mxu0 0.0
  %v1327 = vand.u32 %v992, 4294901760
  %1328 = vmatpush1.msra.mxu0 %v1327
  %1329 = vmatprep.subr.mxu0 0.0
  %1330 = vmatpush1.msra.mxu0 0.0
  %1331 = vmatprep.subr.mxu0 0.0
  %1332 = vmatpush1.msra.mxu0 0.0
  %1333 = vmatprep.subr.mxu0 0.0
  %1334 = vmatpush1.msra.mxu0 0.0
  %1335 = vmatprep.subr.mxu0 0.0
  %1336 = vmatpush1.msra.mxu0 0.0
  %1337 = vmatprep.subr.mxu0 0.0
  %1338 = vmatpush1.msra.mxu0 0.0
  %1339 = vmatprep.subr.mxu0 0.0
  %1340 = vmatpush1.msra.mxu0 0.0
  %1341 = vmatprep.subr.mxu0 0.0
  %1342 = vmatpush1.msra.mxu0 0.0
  %1343 = vmatprep.subr.mxu0 0.0
  %1344 = vmatpush1.msra.mxu0 0.0
  %1345 = vmatprep.subr.mxu0 0.0
  %1346 = vmatpush1.msra.mxu0 0.0
  %1347 = vmatprep.subr.mxu0 0.0
  %1348 = vmatpush1.msra.mxu0 0.0
  %1349 = vmatprep.subr.mxu0 0.0
  %1350 = vmatpush1.msra.mxu0 0.0
  %1351 = vmatprep.subr.mxu0 0.0
  %1352 = vmatpush1.msra.mxu0 0.0
  %1353 = vmatprep.subr.mxu0 0.0
  %1354 = vmatpush1.msra.mxu0 0.0
  %1355 = vmatprep.subr.mxu0 0.0
  %1356 = vmatpush1.msra.mxu0 0.0
  %1357 = vmatprep.subr.mxu0 0.0
  %1358 = vmatpush1.msra.mxu0 0.0
  %1359 = vmatprep.subr.mxu0 0.0
  %1360 = vmatpush1.msra.mxu0 0.0
  %1361 = vmatprep.subr.mxu0 0.0
  %1362 = vmatpush1.msra.mxu0 0.0
  %1363 = vmatprep.subr.mxu0 0.0
  %1364 = vmatpush1.msra.mxu0 0.0
  %1365 = vmatprep.subr.mxu0 0.0
  %1366 = vmatpush1.msra.mxu0 0.0
  %1367 = vmatprep.subr.mxu0 0.0
  %1368 = vmatpush1.msra.mxu0 0.0
  %1369 = vmatprep.subr.mxu0 0.0
  %1370 = vmatpush1.msra.mxu0 0.0
  %1371 = vmatprep.subr.mxu0 0.0
  %1372 = vmatpush1.msra.mxu0 0.0
  %1373 = vmatprep.mubr.f32.mxu0 0.0
  %v1374 = vand.u32 %v999, 4294901760
  %v1375 = vsub.f32 %v999, %v1374
  %v1376 = vand.u32 %v1375, 4294901760
  %1377 = vmatmul.mubr.f32.gmra.mrb[0].mxu0 %v1376
  %v1378 = vpop.f32.mrb[0].mxu0
  %v1379 = vadd.f32 %v1296, %v1378
  %v1380 = vpop.f32.mrb[0].mxu0
  %1381 = vdwg.mxu0
  %1382 = vmatprep.subr.mxu0 0.0
  %v1383 = vand.u32 %v983, 4294901760
  %v1384 = vsub.f32 %v983, %v1383
  %v1385 = vand.u32 %v1384, 4294901760
  %1386 = vmatpush1.msra.mxu0 %v1385
  %1387 = vmatprep.subr.mxu0 0.0
  %v1388 = vand.u32 %v984, 4294901760
  %v1389 = vsub.f32 %v984, %v1388
  %v1390 = vand.u32 %v1389, 4294901760
  %1391 = vmatpush1.msra.mxu0 %v1390
  %1392 = vmatprep.subr.mxu0 0.0
  %v1393 = vand.u32 %v985, 4294901760
  %v1394 = vsub.f32 %v985, %v1393
  %v1395 = vand.u32 %v1394, 4294901760
  %1396 = vmatpush1.msra.mxu0 %v1395
  %1397 = vmatprep.subr.mxu0 0.0
  %v1398 = vand.u32 %v986, 4294901760
  %v1399 = vsub.f32 %v986, %v1398
  %v1400 = vand.u32 %v1399, 4294901760
  %1401 = vmatpush1.msra.mxu0 %v1400
  %1402 = vmatprep.subr.mxu0 0.0
  %v1403 = vand.u32 %v987, 4294901760
  %v1404 = vsub.f32 %v987, %v1403
  %v1405 = vand.u32 %v1404, 4294901760
  %1406 = vmatpush1.msra.mxu0 %v1405
  %1407 = vmatprep.subr.mxu0 0.0
  %v1408 = vand.u32 %v988, 4294901760
  %v1409 = vsub.f32 %v988, %v1408
  %v1410 = vand.u32 %v1409, 4294901760
  %1411 = vmatpush1.msra.mxu0 %v1410
  %1412 = vmatprep.subr.mxu0 0.0
  %v1413 = vand.u32 %v989, 4294901760
  %v1414 = vsub.f32 %v989, %v1413
  %v1415 = vand.u32 %v1414, 4294901760
  %1416 = vmatpush1.msra.mxu0 %v1415
  %1417 = vmatprep.subr.mxu0 0.0
  %v1418 = vand.u32 %v990, 4294901760
  %v1419 = vsub.f32 %v990, %v1418
  %v1420 = vand.u32 %v1419, 4294901760
  %1421 = vmatpush1.msra.mxu0 %v1420
  %1422 = vmatprep.subr.mxu0 0.0
  %v1423 = vand.u32 %v991, 4294901760
  %v1424 = vsub.f32 %v991, %v1423
  %v1425 = vand.u32 %v1424, 4294901760
  %1426 = vmatpush1.msra.mxu0 %v1425
  %1427 = vmatprep.subr.mxu0 0.0
  %v1428 = vand.u32 %v992, 4294901760
  %v1429 = vsub.f32 %v992, %v1428
  %v1430 = vand.u32 %v1429, 4294901760
  %1431 = vmatpush1.msra.mxu0 %v1430
  %1432 = vmatprep.subr.mxu0 0.0
  %1433 = vmatpush1.msra.mxu0 0.0
  %1434 = vmatprep.subr.mxu0 0.0
  %1435 = vmatpush1.msra.mxu0 0.0
  %1436 = vmatprep.subr.mxu0 0.0
  %1437 = vmatpush1.msra.mxu0 0.0
  %1438 = vmatprep.subr.mxu0 0.0
  %1439 = vmatpush1.msra.mxu0 0.0
  %1440 = vmatprep.subr.mxu0 0.0
  %1441 = vmatpush1.msra.mxu0 0.0
  %1442 = vmatprep.subr.mxu0 0.0
  %1443 = vmatpush1.msra.mxu0 0.0
  %1444 = vmatprep.subr.mxu0 0.0
  %1445 = vmatpush1.msra.mxu0 0.0
  %1446 = vmatprep.subr.mxu0 0.0
  %1447 = vmatpush1.msra.mxu0 0.0
  %1448 = vmatprep.subr.mxu0 0.0
  %1449 = vmatpush1.msra.mxu0 0.0
  %1450 = vmatprep.subr.mxu0 0.0
  %1451 = vmatpush1.msra.mxu0 0.0
  %1452 = vmatprep.subr.mxu0 0.0
  %1453 = vmatpush1.msra.mxu0 0.0
  %1454 = vmatprep.subr.mxu0 0.0
  %1455 = vmatpush1.msra.mxu0 0.0
  %1456 = vmatprep.subr.mxu0 0.0
  %1457 = vmatpush1.msra.mxu0 0.0
  %1458 = vmatprep.subr.mxu0 0.0
  %1459 = vmatpush1.msra.mxu0 0.0
  %1460 = vmatprep.subr.mxu0 0.0
  %1461 = vmatpush1.msra.mxu0 0.0
  %1462 = vmatprep.subr.mxu0 0.0
  %1463 = vmatpush1.msra.mxu0 0.0
  %1464 = vmatprep.subr.mxu0 0.0
  %1465 = vmatpush1.msra.mxu0 0.0
  %1466 = vmatprep.subr.mxu0 0.0
  %1467 = vmatpush1.msra.mxu0 0.0
  %1468 = vmatprep.subr.mxu0 0.0
  %1469 = vmatpush1.msra.mxu0 0.0
  %1470 = vmatprep.subr.mxu0 0.0
  %1471 = vmatpush1.msra.mxu0 0.0
  %1472 = vmatprep.subr.mxu0 0.0
  %1473 = vmatpush1.msra.mxu0 0.0
  %1474 = vmatprep.subr.mxu0 0.0
  %1475 = vmatpush1.msra.mxu0 0.0
  %1476 = vmatprep.mubr.f32.mxu0 0.0
  %v1477 = vand.u32 %v999, 4294901760
  %1478 = vmatmul.mubr.f32.gmra.mrb[0].mxu0 %v1477
  %v1479 = vpop.f32.mrb[0].mxu0
  %v1480 = vadd.f32 %v1379, %v1479
  %v1481 = vpop.f32.mrb[0].mxu0
  %1482 = vdwg.mxu0
  %1483 = vmatprep.subr.mxu0 0.0
  %v1484 = vand.u32 %v983, 4294901760
  %1485 = vmatpush1.msra.mxu0 %v1484
  %1486 = vmatprep.subr.mxu0 0.0
  %v1487 = vand.u32 %v984, 4294901760
  %1488 = vmatpush1.msra.mxu0 %v1487
  %1489 = vmatprep.subr.mxu0 0.0
  %v1490 = vand.u32 %v985, 4294901760
  %1491 = vmatpush1.msra.mxu0 %v1490
  %1492 = vmatprep.subr.mxu0 0.0
  %v1493 = vand.u32 %v986, 4294901760
  %1494 = vmatpush1.msra.mxu0 %v1493
  %1495 = vmatprep.subr.mxu0 0.0
  %v1496 = vand.u32 %v987, 4294901760
  %1497 = vmatpush1.msra.mxu0 %v1496
  %1498 = vmatprep.subr.mxu0 0.0
  %v1499 = vand.u32 %v988, 4294901760
  %1500 = vmatpush1.msra.mxu0 %v1499
  %1501 = vmatprep.subr.mxu0 0.0
  %v1502 = vand.u32 %v989, 4294901760
  %1503 = vmatpush1.msra.mxu0 %v1502
  %1504 = vmatprep.subr.mxu0 0.0
  %v1505 = vand.u32 %v990, 4294901760
  %1506 = vmatpush1.msra.mxu0 %v1505
  %1507 = vmatprep.subr.mxu0 0.0
  %v1508 = vand.u32 %v991, 4294901760
  %1509 = vmatpush1.msra.mxu0 %v1508
  %1510 = vmatprep.subr.mxu0 0.0
  %v1511 = vand.u32 %v992, 4294901760
  %1512 = vmatpush1.msra.mxu0 %v1511
  %1513 = vmatprep.subr.mxu0 0.0
  %1514 = vmatpush1.msra.mxu0 0.0
  %1515 = vmatprep.subr.mxu0 0.0
  %1516 = vmatpush1.msra.mxu0 0.0
  %1517 = vmatprep.subr.mxu0 0.0
  %1518 = vmatpush1.msra.mxu0 0.0
  %1519 = vmatprep.subr.mxu0 0.0
  %1520 = vmatpush1.msra.mxu0 0.0
  %1521 = vmatprep.subr.mxu0 0.0
  %1522 = vmatpush1.msra.mxu0 0.0
  %1523 = vmatprep.subr.mxu0 0.0
  %1524 = vmatpush1.msra.mxu0 0.0
  %1525 = vmatprep.subr.mxu0 0.0
  %1526 = vmatpush1.msra.mxu0 0.0
  %1527 = vmatprep.subr.mxu0 0.0
  %1528 = vmatpush1.msra.mxu0 0.0
  %1529 = vmatprep.subr.mxu0 0.0
  %1530 = vmatpush1.msra.mxu0 0.0
  %1531 = vmatprep.subr.mxu0 0.0
  %1532 = vmatpush1.msra.mxu0 0.0
  %1533 = vmatprep.subr.mxu0 0.0
  %1534 = vmatpush1.msra.mxu0 0.0
  %1535 = vmatprep.subr.mxu0 0.0
  %1536 = vmatpush1.msra.mxu0 0.0
  %1537 = vmatprep.subr.mxu0 0.0
  %1538 = vmatpush1.msra.mxu0 0.0
  %1539 = vmatprep.subr.mxu0 0.0
  %1540 = vmatpush1.msra.mxu0 0.0
  %1541 = vmatprep.subr.mxu0 0.0
  %1542 = vmatpush1.msra.mxu0 0.0
  %1543 = vmatprep.subr.mxu0 0.0
  %1544 = vmatpush1.msra.mxu0 0.0
  %1545 = vmatprep.subr.mxu0 0.0
  %1546 = vmatpush1.msra.mxu0 0.0
  %1547 = vmatprep.subr.mxu0 0.0
  %1548 = vmatpush1.msra.mxu0 0.0
  %1549 = vmatprep.subr.mxu0 0.0
  %1550 = vmatpush1.msra.mxu0 0.0
  %1551 = vmatprep.subr.mxu0 0.0
  %1552 = vmatpush1.msra.mxu0 0.0
  %1553 = vmatprep.subr.mxu0 0.0
  %1554 = vmatpush1.msra.mxu0 0.0
  %1555 = vmatprep.subr.mxu0 0.0
  %1556 = vmatpush1.msra.mxu0 0.0
  %1557 = vmatprep.mubr.f32.mxu0 0.0
  %v1558 = vand.u32 %v999, 4294901760
  %1559 = vmatmul.mubr.f32.gmra.mrb[0].mxu0 %v1558
  %v1560 = vpop.f32.mrb[0].mxu0
  %v1561 = vadd.f32 %v1480, %v1560
  %v1562 = vpop.f32.mrb[0].mxu0
  %1563 = vdwg.mxu0
  %1564 = vst [vmem:[%s2] sm:$0xff] %v1561
  // Predicated region
  $region10: #{torch_net_forward.1} parent=0 // pred_check
    _
  $region11: #{torch_net_forward.1} parent=0 // pred_check_branch
    %1566 = sbr.rel (0) target = $region13
  $region12: #{torch_net_forward.1} parent=0 // pred_region
    _
  $region13: #{torch_net_forward.1} parent=0 // pred_fallthru
    _
  // Predicated region
  $region14: #{torch_net_forward.1} parent=0 // pred_check
    _
  $region15: #{torch_net_forward.1} parent=0 // pred_check_branch
    %1568 = sbr.rel (0) target = $region17
  $region16: #{torch_net_forward.1} parent=0 // pred_region
    _
  $region17: #{torch_net_forward.1} parent=0 // pred_fallthru
    _

</llo_original>
